<compile_context>
chip_gen: v6e
topology: v6e:2x2x1
jax: 0.10.0
libtpu: 0.0.40
codegen_flags: <defaults>
</compile_context>

<pallas_src>
import functools

import jax
import jax.numpy as jnp
import numpy as np
from jax import lax
from jax.experimental import pallas as pl
from jax.experimental.pallas import tpu as pltpu


# ----------------------------------------------------------------------------
# In-kernel helpers
# ----------------------------------------------------------------------------
def _pool2x2(x):
    # x: (R, W, C) with R, W even  ->  (R//2, W//2, C)
    r, w, c = x.shape
    x = jnp.max(x.reshape(r // 2, 2, w, c), axis=1)
    x = jnp.max(x.reshape(r // 2, w // 2, 2, c), axis=2)
    return x


def _w_slab3(x):
    # x: (R, Wp, C) -> (R, Wp, 3*C) with slab[:, w, kx*C + c] = x[:, w+kx-1, c]
    # (zero columns supply the conv's horizontal zero padding).
    r, wp, c = x.shape
    z = jnp.zeros((r, 1, c), x.dtype)
    left = jnp.concatenate([z, x[:, :wp - 1, :]], axis=1)     # kx = 0
    right = jnp.concatenate([x[:, 1:, :], z], axis=1)         # kx = 2
    return jnp.concatenate([left, x, right], axis=-1)


# ----------------------------------------------------------------------------
# Fused kernel
# ----------------------------------------------------------------------------
def _down_fused_kernel(x_main_ref, x_top_ref, x_bot_ref,
                       w1_ref, s1_ref, b1_ref,
                       w2_ref, s2_ref, b2_ref,
                       o_ref, *, hp, t_out):
    # x_main_ref: (1, 2*t_out, W, Cin)   rows owned by this tile
    # x_top_ref : (1, 4, W, Cin)         4 input rows above (clamped at top)
    # x_bot_ref : (1, 4, W, Cin)         4 input rows below (clamped at bottom)
    # w*_ref    : (3, 3*Cin, Cmid) / (3, 3*Cmid, Cout)   bf16
    # s*/b*_ref : (1, C)                 folded BN (eval) + conv bias, f32
    # o_ref     : (1, t_out, Wp, Cout)
    i = pl.program_id(1)

    cin = x_main_ref.shape[-1]
    cmid = w1_ref.shape[-1]
    cout = o_ref.shape[-1]
    wp = o_ref.shape[2]
    h1 = t_out + 2                      # conv1 rows this tile computes
    rows = t_out + 4                    # pooled rows (incl. +-2 halo) in view

    # ---- fused 2x2 max-pool (f32) -------------------------------------------
    pooled = jnp.concatenate(
        [_pool2x2(x_top_ref[0]), _pool2x2(x_main_ref[0]), _pool2x2(x_bot_ref[0])],
        axis=0)                                            # (rows, Wp, Cin)

    # Pooled halo rows outside the image are exactly conv1's zero padding.
    g0 = i * t_out - 2 + lax.broadcasted_iota(jnp.int32, pooled.shape, 0)
    pooled = jnp.where((g0 >= 0) & (g0 < hp), pooled, 0.0)

    # ---- conv1 (3x3, pad=1) + BN + ReLU: 3 MXU dots, K = 3*Cin --------------
    slab1 = _w_slab3(pooled).reshape(rows * wp, 3 * cin).astype(jnp.bfloat16)
    acc1 = jnp.zeros((h1 * wp, cmid), jnp.float32)
    for ky in range(3):
        acc1 += jnp.dot(slab1[ky * wp:(ky + h1) * wp], w1_ref[ky],
                        preferred_element_type=jnp.float32)
    y1 = jnp.maximum(acc1 * s1_ref[...] + b1_ref[...], 0.0)
    y1 = y1.reshape(h1, wp, cmid)

    # conv1 rows that fall outside the image act as conv2's zero padding.
    g1 = i * t_out - 1 + lax.broadcasted_iota(jnp.int32, y1.shape, 0)
    y1 = jnp.where((g1 >= 0) & (g1 < hp), y1, 0.0)

    # ---- conv2 (3x3, pad=1) + BN + ReLU: 3 MXU dots, K = 3*Cmid -------------
    slab2 = _w_slab3(y1).reshape(h1 * wp, 3 * cmid).astype(jnp.bfloat16)
    acc2 = jnp.zeros((t_out * wp, cout), jnp.float32)
    for ky in range(3):
        acc2 += jnp.dot(slab2[ky * wp:(ky + t_out) * wp], w2_ref[ky],
                        preferred_element_type=jnp.float32)
    y2 = jnp.maximum(acc2 * s2_ref[...] + b2_ref[...], 0.0)
    o_ref[0] = y2.reshape(t_out, wp, cout).astype(o_ref.dtype)


# ----------------------------------------------------------------------------
# Tile sizing / VMEM
# ----------------------------------------------------------------------------
def _vmem_cap_bytes():
    try:
        return int(pltpu.get_tpu_info().vmem_capacity_bytes)
    except Exception:
        return 64 * 1024 * 1024          # conservative (v7x physical VMEM)


def _per_step_vmem_bytes(t_out, w, cin, cmid, cout):
    wp = w // 2
    h1, rows = t_out + 2, t_out + 4
    f32, bf16 = 4, 2
    in_blk = (2 * t_out + 8) * w * cin * f32               # main + 2 halo blocks
    out_blk = t_out * wp * cout * f32
    wgt = (9 * cin * cmid + 9 * cmid * cout) * bf16 + 2 * (cmid + cout) * f32
    tmp = (rows * wp * cin * f32                           # pooled
           + rows * wp * 3 * cin * (f32 + bf16)            # slab1 (f32 + bf16)
           + h1 * wp * cmid * 2 * f32                      # acc1 / y1
           + h1 * wp * 3 * cmid * (f32 + bf16)             # slab2 (f32 + bf16)
           + t_out * wp * cout * 2 * f32)                  # acc2 / y2
    # inputs/outputs double-buffered by the pipeline; weights single-buffered
    return 2 * (in_blk + out_blk) + wgt + tmp


def _choose_tile_rows(hp, w, cin, cmid, cout, vmem_cap, requested, n_batch):
    if requested is not None:
        t = int(requested)
        if hp % t or (t != hp and t % 2):
            raise ValueError("tile_rows must be an even divisor of H//2.")
        return t
    budget = int(vmem_cap * 0.55)
    cands = [t for t in range(2, hp + 1, 2) if hp % t == 0]
    if not cands:
        # TODO(synk): odd H//2 runs as a single (unchecked-budget) row tile.
        return hp
    if n_batch == 1:
        # Keep >= 2 row tiles so both v7x TensorCores get work.
        halved = [t for t in cands if hp // t >= 2]
        if halved:
            cands = halved
    best = cands[0]
    for t in cands:                      # ascending -> pick largest that fits
        if _per_step_vmem_bytes(t, w, cin, cmid, cout) <= budget:
            best = t
    return best


# ----------------------------------------------------------------------------
# Pallas wrapper (NHWC)
# ----------------------------------------------------------------------------
def _const_spec(shape):
    nd = len(shape)
    return pl.BlockSpec(shape, lambda *_: (0,) * nd,
                        pipeline_mode=pl.Buffered(1))


def down_fused(x_nhwc, w1, scale1, bias1, w2, scale2, bias2, *, tile_rows=None):
    n, h, w, cin = x_nhwc.shape
    if h % 2 or w % 2:
        raise ValueError("MaxPool2d(2) path requires even H and W.")
    if h < 4:
        # TODO(synk): tiny images (H < 4) would need a smaller halo block.
        raise ValueError("down_fused requires H >= 4.")
    hp, wp = h // 2, w // 2
    cmid = w1.shape[-1]
    cout = w2.shape[-1]

    vmem_cap = _vmem_cap_bytes()
    t_out = _choose_tile_rows(hp, w, cin, cmid, cout, vmem_cap, tile_rows, n)
    n_tiles = hp // t_out
    t_in = 2 * t_out
    tb = max(t_in // 4, 1)               # main-tile size in 4-row halo blocks
    last_hblk = h // 4 - 1

    # Weights as bf16 (3, 3*Cin, Cout); BN scale/bias stay f32.
    w1r = jnp.asarray(w1, jnp.bfloat16).reshape(3, 3 * cin, cmid)
    w2r = jnp.asarray(w2, jnp.bfloat16).reshape(3, 3 * cmid, cout)
    s1r = jnp.asarray(scale1, jnp.float32).reshape(1, cmid)
    b1r = jnp.asarray(bias1, jnp.float32).reshape(1, cmid)
    s2r = jnp.asarray(scale2, jnp.float32).reshape(1, cout)
    b2r = jnp.asarray(bias2, jnp.float32).reshape(1, cout)

    kernel = functools.partial(_down_fused_kernel, hp=hp, t_out=t_out)

    return pl.pallas_call(
        kernel,
        out_shape=jax.ShapeDtypeStruct((n, hp, wp, cout), jnp.float32),
        grid=(n, n_tiles),
        in_specs=[
            # rows owned by this tile
            pl.BlockSpec((1, t_in, w, cin), lambda b, i: (b, i, 0, 0)),
            # 4 input rows (2 pooled rows) above, clamped at the top border
            pl.BlockSpec((1, 4, w, cin),
                         lambda b, i: (b, jnp.maximum(i * tb - 1, 0), 0, 0)),
            # 4 input rows (2 pooled rows) below, clamped at the bottom border
            pl.BlockSpec((1, 4, w, cin),
                         lambda b, i: (b, jnp.minimum((i + 1) * tb, last_hblk),
                                       0, 0)),
            # grid-invariant operands: single-buffered
            _const_spec((3, 3 * cin, cmid)),
            _const_spec((1, cmid)),
            _const_spec((1, cmid)),
            _const_spec((3, 3 * cmid, cout)),
            _const_spec((1, cout)),
            _const_spec((1, cout)),
        ],
        out_specs=pl.BlockSpec((1, t_out, wp, cout), lambda b, i: (b, i, 0, 0)),
        compiler_params=pltpu.CompilerParams(
            dimension_semantics=("parallel", "parallel"),
            vmem_limit_bytes=min(int(vmem_cap * 3 // 4), 112 * 1024 * 1024)),
    )(x_nhwc, x_nhwc, x_nhwc, w1r, s1r, b1r, w2r, s2r, b2r)


# ----------------------------------------------------------------------------
# Parameter construction (deterministic, synthetic) with BN folded (eval mode)
# ----------------------------------------------------------------------------
def make_params(key, in_channels, out_channels):
    ks = jax.random.split(key, 12)
    eps = 1e-5

    def conv_init(kw, kb, cin, cout):
        fan_in = cin * 9
        bound = 1.0 / np.sqrt(fan_in)
        wgt = jax.random.uniform(kw, (3, 3, cin, cout), jnp.float32,
                                 -bound, bound)      # HWIO
        b = jax.random.uniform(kb, (cout,), jnp.float32, -bound, bound)
        return wgt, b

    def bn_init(kg, kb, km, kv, c):
        gamma = 1.0 + 0.1 * jax.random.normal(kg, (c,), jnp.float32)
        beta = 0.1 * jax.random.normal(kb, (c,), jnp.float32)
        mean = 0.1 * jax.random.normal(km, (c,), jnp.float32)
        var = jnp.abs(1.0 + 0.1 * jax.random.normal(kv, (c,), jnp.float32))
        return gamma, beta, mean, var

    w1, b1 = conv_init(ks[0], ks[1], in_channels, out_channels)
    g1, be1, m1, v1 = bn_init(ks[2], ks[3], ks[4], ks[5], out_channels)
    w2, b2 = conv_init(ks[6], ks[7], out_channels, out_channels)
    g2, be2, m2, v2 = bn_init(ks[8], ks[9], ks[10], ks[11], out_channels)

    # Fold BN (eval mode) + conv bias: y = scale * conv(x) + bias
    s1 = g1 / jnp.sqrt(v1 + eps)
    fb1 = be1 + s1 * (b1 - m1)
    s2 = g2 / jnp.sqrt(v2 + eps)
    fb2 = be2 + s2 * (b2 - m2)

    return dict(w1=w1, scale1=s1, bias1=fb1, w2=w2, scale2=s2, bias2=fb2)


# ----------------------------------------------------------------------------
# Down.forward (NCHW public interface)
# ----------------------------------------------------------------------------
@functools.partial(jax.jit, static_argnames=("tile_rows",))
def down_forward(x_nchw, params, tile_rows=None):
    x = jnp.transpose(x_nchw, (0, 2, 3, 1))              # NCHW -> NHWC
    y = down_fused(x, params["w1"], params["scale1"], params["bias1"],
                   params["w2"], params["scale2"], params["bias2"],
                   tile_rows=tile_rows)
    return jnp.transpose(y, (0, 3, 1, 2))                # NHWC -> NCHW


# ----------------------------------------------------------------------------
# Pure-JAX reference (same bf16-matmul / f32-accumulate numerics)
# ----------------------------------------------------------------------------
def down_reference(x_nchw, params):
    x = jnp.transpose(x_nchw, (0, 2, 3, 1))
    n, h, w, c = x.shape
    x = jnp.max(x.reshape(n, h // 2, 2, w // 2, 2, c), axis=(2, 4))

    def conv_bn_relu_ref(x, wgt, scale, bias):
        y = lax.conv_general_dilated(
            x.astype(jnp.bfloat16), wgt.astype(jnp.bfloat16),
            window_strides=(1, 1), padding=((1, 1), (1, 1)),
            dimension_numbers=("NHWC", "HWIO", "NHWC"),
            preferred_element_type=jnp.float32)
        return jnp.maximum(y * scale + bias, 0.0)

    x = conv_bn_relu_ref(x, params["w1"], params["scale1"], params["bias1"])
    x = conv_bn_relu_ref(x, params["w2"], params["scale2"], params["bias2"])
    return jnp.transpose(x, (0, 3, 1, 2))


if __name__ == "__main__":
    key = jax.random.PRNGKey(0)
    k_x, k_p = jax.random.split(key)

    batch, in_channels, out_channels, spatial = 2, 4, 8, 16
    x = jax.random.normal(k_x, (batch, in_channels, spatial, spatial),
                          dtype=jnp.float32)
    params = make_params(k_p, in_channels, out_channels)

    ref = down_reference(x, params)

    # Multi-tile path: exercises first/middle/last row-halo handling.
    out_tiled = jax.block_until_ready(down_forward(x, params, tile_rows=2))
    np.testing.assert_allclose(np.asarray(out_tiled), np.asarray(ref),
                               rtol=2e-3, atol=2e-3)

    # Default heuristic tile size (VMEM-budget based).
    out = jax.block_until_ready(down_forward(x, params))
    np.testing.assert_allclose(np.asarray(out), np.asarray(ref),
                               rtol=2e-3, atol=2e-3)

    assert out.shape == (batch, out_channels, spatial // 2, spatial // 2)
    print("KERNEL_OK")
</pallas_src>

<mosaic_0001>
module attributes {stable_mosaic.version = 11 : i64} {
  func.func @_down_fused_kernel(%arg0: i32, %arg1: i32, %arg2: memref<1x4x16x4xf32, #tpu.memory_space<vmem>>, %arg3: memref<1x4x16x4xf32, #tpu.memory_space<vmem>>, %arg4: memref<1x4x16x4xf32, #tpu.memory_space<vmem>>, %arg5: memref<3x12x8xbf16, #tpu.memory_space<vmem>>, %arg6: memref<1x8xf32, #tpu.memory_space<vmem>>, %arg7: memref<1x8xf32, #tpu.memory_space<vmem>>, %arg8: memref<3x24x8xbf16, #tpu.memory_space<vmem>>, %arg9: memref<1x8xf32, #tpu.memory_space<vmem>>, %arg10: memref<1x8xf32, #tpu.memory_space<vmem>>, %arg11: memref<1x2x8x8xf32, #tpu.memory_space<vmem>>) attributes {dimension_semantics = [#tpu.dimension_semantics<parallel>, #tpu.dimension_semantics<parallel>], iteration_bounds = array<i64: 2, 4>, scalar_prefetch = 0 : i64, scratch_operands = 0 : i64, tpu.core_type = #tpu.core_type<tc>, window_params = [{transform_indices = @transform_0, window_bounds = array<i64: 1, 4, 16, 4>}, {transform_indices = @transform_1, window_bounds = array<i64: 1, 4, 16, 4>}, {transform_indices = @transform_2, window_bounds = array<i64: 1, 4, 16, 4>}, {pipeline_mode = #tpu.pipeline_mode<synchronous>, transform_indices = @transform_3, window_bounds = array<i64: 3, 12, 8>}, {pipeline_mode = #tpu.pipeline_mode<synchronous>, transform_indices = @transform_4, window_bounds = array<i64: 1, 8>}, {pipeline_mode = #tpu.pipeline_mode<synchronous>, transform_indices = @transform_5, window_bounds = array<i64: 1, 8>}, {pipeline_mode = #tpu.pipeline_mode<synchronous>, transform_indices = @transform_6, window_bounds = array<i64: 3, 24, 8>}, {pipeline_mode = #tpu.pipeline_mode<synchronous>, transform_indices = @transform_7, window_bounds = array<i64: 1, 8>}, {pipeline_mode = #tpu.pipeline_mode<synchronous>, transform_indices = @transform_8, window_bounds = array<i64: 1, 8>}, {transform_indices = @transform_9, window_bounds = array<i64: 1, 2, 8, 8>}]} {
    %c0 = arith.constant 0 : index
    %c0_0 = arith.constant 0 : index
    %c0_1 = arith.constant 0 : index
    %c0_2 = arith.constant 0 : index
    %0 = vector.load %arg3[%c0, %c0_0, %c0_1, %c0_2] : memref<1x4x16x4xf32, #tpu.memory_space<vmem>>, vector<1x4x16x4xf32>
    %1 = vector.shape_cast %0 : vector<1x4x16x4xf32> to vector<4x16x4xf32>
    %2 = vector.shape_cast %1 : vector<4x16x4xf32> to vector<2x2x16x4xf32>
    %cst = arith.constant dense<0xFF800000> : vector<2x16x4xf32>
    %3 = vector.multi_reduction <maximumf>, %2, %cst [1] : vector<2x2x16x4xf32> to vector<2x16x4xf32>
    %4 = vector.shape_cast %3 : vector<2x16x4xf32> to vector<2x8x2x4xf32>
    %cst_3 = arith.constant dense<0xFF800000> : vector<2x8x4xf32>
    %5 = vector.multi_reduction <maximumf>, %4, %cst_3 [2] : vector<2x8x2x4xf32> to vector<2x8x4xf32>
    %c0_4 = arith.constant 0 : index
    %c0_5 = arith.constant 0 : index
    %c0_6 = arith.constant 0 : index
    %c0_7 = arith.constant 0 : index
    %6 = vector.load %arg2[%c0_4, %c0_5, %c0_6, %c0_7] : memref<1x4x16x4xf32, #tpu.memory_space<vmem>>, vector<1x4x16x4xf32>
    %7 = vector.shape_cast %6 : vector<1x4x16x4xf32> to vector<4x16x4xf32>
    %8 = vector.shape_cast %7 : vector<4x16x4xf32> to vector<2x2x16x4xf32>
    %cst_8 = arith.constant dense<0xFF800000> : vector<2x16x4xf32>
    %9 = vector.multi_reduction <maximumf>, %8, %cst_8 [1] : vector<2x2x16x4xf32> to vector<2x16x4xf32>
    %10 = vector.shape_cast %9 : vector<2x16x4xf32> to vector<2x8x2x4xf32>
    %cst_9 = arith.constant dense<0xFF800000> : vector<2x8x4xf32>
    %11 = vector.multi_reduction <maximumf>, %10, %cst_9 [2] : vector<2x8x2x4xf32> to vector<2x8x4xf32>
    %c0_10 = arith.constant 0 : index
    %c0_11 = arith.constant 0 : index
    %c0_12 = arith.constant 0 : index
    %c0_13 = arith.constant 0 : index
    %12 = vector.load %arg4[%c0_10, %c0_11, %c0_12, %c0_13] : memref<1x4x16x4xf32, #tpu.memory_space<vmem>>, vector<1x4x16x4xf32>
    %13 = vector.shape_cast %12 : vector<1x4x16x4xf32> to vector<4x16x4xf32>
    %14 = vector.shape_cast %13 : vector<4x16x4xf32> to vector<2x2x16x4xf32>
    %cst_14 = arith.constant dense<0xFF800000> : vector<2x16x4xf32>
    %15 = vector.multi_reduction <maximumf>, %14, %cst_14 [1] : vector<2x2x16x4xf32> to vector<2x16x4xf32>
    %16 = vector.shape_cast %15 : vector<2x16x4xf32> to vector<2x8x2x4xf32>
    %cst_15 = arith.constant dense<0xFF800000> : vector<2x8x4xf32>
    %17 = vector.multi_reduction <maximumf>, %16, %cst_15 [2] : vector<2x8x2x4xf32> to vector<2x8x4xf32>
    %18 = tpu.concatenate %5, %11, %17 in 0 : vector<2x8x4xf32>, vector<2x8x4xf32>, vector<2x8x4xf32> -> vector<6x8x4xf32>
    %c2_i32 = arith.constant 2 : i32
    %19 = arith.muli %arg1, %c2_i32 : i32
    %c2_i32_16 = arith.constant 2 : i32
    %20 = arith.subi %19, %c2_i32_16 : i32
    %21 = tpu.iota {dimensions = array<i32: 0>} : vector<6x8x4xi32>
    %22 = vector.broadcast %20 : i32 to vector<6x8x4xi32>
    %23 = arith.addi %22, %21 : vector<6x8x4xi32>
    %c0_i32 = arith.constant 0 : i32
    %24 = vector.broadcast %c0_i32 : i32 to vector<6x8x4xi32>
    %25 = arith.cmpi sge, %23, %24 : vector<6x8x4xi32>
    %c8_i32 = arith.constant 8 : i32
    %26 = vector.broadcast %c8_i32 : i32 to vector<6x8x4xi32>
    %27 = arith.cmpi slt, %23, %26 : vector<6x8x4xi32>
    %28 = arith.andi %25, %27 : vector<6x8x4xi1>
    %cst_17 = arith.constant 0.000000e+00 : f32
    %29 = vector.broadcast %cst_17 : f32 to vector<6x8x4xf32>
    %30 = arith.select %28, %18, %29 : vector<6x8x4xi1>, vector<6x8x4xf32>
    %cst_18 = arith.constant 0.000000e+00 : f32
    %31 = vector.broadcast %cst_18 : f32 to vector<6x1x4xf32>
    %32 = vector.extract_strided_slice %30 {offsets = [0, 0, 0], sizes = [6, 7, 4], strides = [1, 1, 1]} : vector<6x8x4xf32> to vector<6x7x4xf32>
    %33 = tpu.concatenate %31, %32 in 1 : vector<6x1x4xf32>, vector<6x7x4xf32> -> vector<6x8x4xf32>
    %34 = vector.extract_strided_slice %30 {offsets = [0, 1, 0], sizes = [6, 7, 4], strides = [1, 1, 1]} : vector<6x8x4xf32> to vector<6x7x4xf32>
    %35 = tpu.concatenate %34, %31 in 1 : vector<6x7x4xf32>, vector<6x1x4xf32> -> vector<6x8x4xf32>
    %36 = tpu.concatenate %33, %30, %35 in 2 : vector<6x8x4xf32>, vector<6x8x4xf32>, vector<6x8x4xf32> -> vector<6x8x12xf32>
    %37 = vector.shape_cast %36 : vector<6x8x12xf32> to vector<48x12xf32>
    %38 = arith.truncf %37 : vector<48x12xf32> to vector<48x12xbf16>
    %cst_19 = arith.constant 0.000000e+00 : f32
    %39 = vector.broadcast %cst_19 : f32 to vector<32x8xf32>
    %40 = vector.extract_strided_slice %38 {offsets = [0, 0], sizes = [32, 12], strides = [1, 1]} : vector<48x12xbf16> to vector<32x12xbf16>
    %c0_20 = arith.constant 0 : index
    %c0_21 = arith.constant 0 : index
    %c0_22 = arith.constant 0 : index
    %41 = vector.load %arg5[%c0_20, %c0_21, %c0_22] : memref<3x12x8xbf16, #tpu.memory_space<vmem>>, vector<1x12x8xbf16>
    %42 = vector.shape_cast %41 : vector<1x12x8xbf16> to vector<12x8xbf16>
    %cst_23 = arith.constant dense<0.000000e+00> : vector<32x8xf32>
    %43 = tpu.matmul %40, %42, %cst_23 {dimension_numbers = #tpu.dot_dimension_numbers<[1], [0], [0], [1], [0, 0, 1, 1], [], []>} : vector<32x12xbf16>, vector<12x8xbf16>, vector<32x8xf32> -> vector<32x8xf32>
    %44 = arith.addf %39, %43 : vector<32x8xf32>
    %45 = vector.extract_strided_slice %38 {offsets = [8, 0], sizes = [32, 12], strides = [1, 1]} : vector<48x12xbf16> to vector<32x12xbf16>
    %c1 = arith.constant 1 : index
    %c0_24 = arith.constant 0 : index
    %c0_25 = arith.constant 0 : index
    %46 = vector.load %arg5[%c1, %c0_24, %c0_25] : memref<3x12x8xbf16, #tpu.memory_space<vmem>>, vector<1x12x8xbf16>
    %47 = vector.shape_cast %46 : vector<1x12x8xbf16> to vector<12x8xbf16>
    %cst_26 = arith.constant dense<0.000000e+00> : vector<32x8xf32>
    %48 = tpu.matmul %45, %47, %cst_26 {dimension_numbers = #tpu.dot_dimension_numbers<[1], [0], [0], [1], [0, 0, 1, 1], [], []>} : vector<32x12xbf16>, vector<12x8xbf16>, vector<32x8xf32> -> vector<32x8xf32>
    %49 = arith.addf %44, %48 : vector<32x8xf32>
    %50 = vector.extract_strided_slice %38 {offsets = [16, 0], sizes = [32, 12], strides = [1, 1]} : vector<48x12xbf16> to vector<32x12xbf16>
    %c2 = arith.constant 2 : index
    %c0_27 = arith.constant 0 : index
    %c0_28 = arith.constant 0 : index
    %51 = vector.load %arg5[%c2, %c0_27, %c0_28] : memref<3x12x8xbf16, #tpu.memory_space<vmem>>, vector<1x12x8xbf16>
    %52 = vector.shape_cast %51 : vector<1x12x8xbf16> to vector<12x8xbf16>
    %cst_29 = arith.constant dense<0.000000e+00> : vector<32x8xf32>
    %53 = tpu.matmul %50, %52, %cst_29 {dimension_numbers = #tpu.dot_dimension_numbers<[1], [0], [0], [1], [0, 0, 1, 1], [], []>} : vector<32x12xbf16>, vector<12x8xbf16>, vector<32x8xf32> -> vector<32x8xf32>
    %54 = arith.addf %49, %53 : vector<32x8xf32>
    %c0_30 = arith.constant 0 : index
    %c0_31 = arith.constant 0 : index
    %55 = vector.load %arg6[%c0_30, %c0_31] : memref<1x8xf32, #tpu.memory_space<vmem>>, vector<1x8xf32>
    %56 = vector.broadcast %55 : vector<1x8xf32> to vector<32x8xf32>
    %57 = arith.mulf %54, %56 : vector<32x8xf32>
    %c0_32 = arith.constant 0 : index
    %c0_33 = arith.constant 0 : index
    %58 = vector.load %arg7[%c0_32, %c0_33] : memref<1x8xf32, #tpu.memory_space<vmem>>, vector<1x8xf32>
    %59 = vector.broadcast %58 : vector<1x8xf32> to vector<32x8xf32>
    %60 = arith.addf %57, %59 : vector<32x8xf32>
    %cst_34 = arith.constant 0.000000e+00 : f32
    %61 = vector.broadcast %cst_34 : f32 to vector<32x8xf32>
    %62 = arith.maximumf %60, %61 : vector<32x8xf32>
    %63 = vector.shape_cast %62 : vector<32x8xf32> to vector<4x8x8xf32>
    %c2_i32_35 = arith.constant 2 : i32
    %64 = arith.muli %arg1, %c2_i32_35 : i32
    %c1_i32 = arith.constant 1 : i32
    %65 = arith.subi %64, %c1_i32 : i32
    %66 = tpu.iota {dimensions = array<i32: 0>} : vector<4x8x8xi32>
    %67 = vector.broadcast %65 : i32 to vector<4x8x8xi32>
    %68 = arith.addi %67, %66 : vector<4x8x8xi32>
    %c0_i32_36 = arith.constant 0 : i32
    %69 = vector.broadcast %c0_i32_36 : i32 to vector<4x8x8xi32>
    %70 = arith.cmpi sge, %68, %69 : vector<4x8x8xi32>
    %c8_i32_37 = arith.constant 8 : i32
    %71 = vector.broadcast %c8_i32_37 : i32 to vector<4x8x8xi32>
    %72 = arith.cmpi slt, %68, %71 : vector<4x8x8xi32>
    %73 = arith.andi %70, %72 : vector<4x8x8xi1>
    %cst_38 = arith.constant 0.000000e+00 : f32
    %74 = vector.broadcast %cst_38 : f32 to vector<4x8x8xf32>
    %75 = arith.select %73, %63, %74 : vector<4x8x8xi1>, vector<4x8x8xf32>
    %cst_39 = arith.constant 0.000000e+00 : f32
    %76 = vector.broadcast %cst_39 : f32 to vector<4x1x8xf32>
    %77 = vector.extract_strided_slice %75 {offsets = [0, 0, 0], sizes = [4, 7, 8], strides = [1, 1, 1]} : vector<4x8x8xf32> to vector<4x7x8xf32>
    %78 = tpu.concatenate %76, %77 in 1 : vector<4x1x8xf32>, vector<4x7x8xf32> -> vector<4x8x8xf32>
    %79 = vector.extract_strided_slice %75 {offsets = [0, 1, 0], sizes = [4, 7, 8], strides = [1, 1, 1]} : vector<4x8x8xf32> to vector<4x7x8xf32>
    %80 = tpu.concatenate %79, %76 in 1 : vector<4x7x8xf32>, vector<4x1x8xf32> -> vector<4x8x8xf32>
    %81 = tpu.concatenate %78, %75, %80 in 2 : vector<4x8x8xf32>, vector<4x8x8xf32>, vector<4x8x8xf32> -> vector<4x8x24xf32>
    %82 = vector.shape_cast %81 : vector<4x8x24xf32> to vector<32x24xf32>
    %83 = arith.truncf %82 : vector<32x24xf32> to vector<32x24xbf16>
    %cst_40 = arith.constant 0.000000e+00 : f32
    %84 = vector.broadcast %cst_40 : f32 to vector<16x8xf32>
    %85 = vector.extract_strided_slice %83 {offsets = [0, 0], sizes = [16, 24], strides = [1, 1]} : vector<32x24xbf16> to vector<16x24xbf16>
    %c0_41 = arith.constant 0 : index
    %c0_42 = arith.constant 0 : index
    %c0_43 = arith.constant 0 : index
    %86 = vector.load %arg8[%c0_41, %c0_42, %c0_43] : memref<3x24x8xbf16, #tpu.memory_space<vmem>>, vector<1x24x8xbf16>
    %87 = vector.shape_cast %86 : vector<1x24x8xbf16> to vector<24x8xbf16>
    %cst_44 = arith.constant dense<0.000000e+00> : vector<16x8xf32>
    %88 = tpu.matmul %85, %87, %cst_44 {dimension_numbers = #tpu.dot_dimension_numbers<[1], [0], [0], [1], [0, 0, 1, 1], [], []>} : vector<16x24xbf16>, vector<24x8xbf16>, vector<16x8xf32> -> vector<16x8xf32>
    %89 = arith.addf %84, %88 : vector<16x8xf32>
    %90 = vector.extract_strided_slice %83 {offsets = [8, 0], sizes = [16, 24], strides = [1, 1]} : vector<32x24xbf16> to vector<16x24xbf16>
    %c1_45 = arith.constant 1 : index
    %c0_46 = arith.constant 0 : index
    %c0_47 = arith.constant 0 : index
    %91 = vector.load %arg8[%c1_45, %c0_46, %c0_47] : memref<3x24x8xbf16, #tpu.memory_space<vmem>>, vector<1x24x8xbf16>
    %92 = vector.shape_cast %91 : vector<1x24x8xbf16> to vector<24x8xbf16>
    %cst_48 = arith.constant dense<0.000000e+00> : vector<16x8xf32>
    %93 = tpu.matmul %90, %92, %cst_48 {dimension_numbers = #tpu.dot_dimension_numbers<[1], [0], [0], [1], [0, 0, 1, 1], [], []>} : vector<16x24xbf16>, vector<24x8xbf16>, vector<16x8xf32> -> vector<16x8xf32>
    %94 = arith.addf %89, %93 : vector<16x8xf32>
    %95 = vector.extract_strided_slice %83 {offsets = [16, 0], sizes = [16, 24], strides = [1, 1]} : vector<32x24xbf16> to vector<16x24xbf16>
    %c2_49 = arith.constant 2 : index
    %c0_50 = arith.constant 0 : index
    %c0_51 = arith.constant 0 : index
    %96 = vector.load %arg8[%c2_49, %c0_50, %c0_51] : memref<3x24x8xbf16, #tpu.memory_space<vmem>>, vector<1x24x8xbf16>
    %97 = vector.shape_cast %96 : vector<1x24x8xbf16> to vector<24x8xbf16>
    %cst_52 = arith.constant dense<0.000000e+00> : vector<16x8xf32>
    %98 = tpu.matmul %95, %97, %cst_52 {dimension_numbers = #tpu.dot_dimension_numbers<[1], [0], [0], [1], [0, 0, 1, 1], [], []>} : vector<16x24xbf16>, vector<24x8xbf16>, vector<16x8xf32> -> vector<16x8xf32>
    %99 = arith.addf %94, %98 : vector<16x8xf32>
    %c0_53 = arith.constant 0 : index
    %c0_54 = arith.constant 0 : index
    %100 = vector.load %arg9[%c0_53, %c0_54] : memref<1x8xf32, #tpu.memory_space<vmem>>, vector<1x8xf32>
    %101 = vector.broadcast %100 : vector<1x8xf32> to vector<16x8xf32>
    %102 = arith.mulf %99, %101 : vector<16x8xf32>
    %c0_55 = arith.constant 0 : index
    %c0_56 = arith.constant 0 : index
    %103 = vector.load %arg10[%c0_55, %c0_56] : memref<1x8xf32, #tpu.memory_space<vmem>>, vector<1x8xf32>
    %104 = vector.broadcast %103 : vector<1x8xf32> to vector<16x8xf32>
    %105 = arith.addf %102, %104 : vector<16x8xf32>
    %cst_57 = arith.constant 0.000000e+00 : f32
    %106 = vector.broadcast %cst_57 : f32 to vector<16x8xf32>
    %107 = arith.maximumf %105, %106 : vector<16x8xf32>
    %108 = vector.shape_cast %107 : vector<16x8xf32> to vector<2x8x8xf32>
    %c0_58 = arith.constant 0 : index
    %c0_59 = arith.constant 0 : index
    %c0_60 = arith.constant 0 : index
    %c0_61 = arith.constant 0 : index
    %109 = vector.load %arg11[%c0_58, %c0_59, %c0_60, %c0_61] : memref<1x2x8x8xf32, #tpu.memory_space<vmem>>, vector<1x2x8x8xf32>
    %110 = vector.shape_cast %109 : vector<1x2x8x8xf32> to vector<2x8x8xf32>
    %111 = vector.shape_cast %108 : vector<2x8x8xf32> to vector<1x2x8x8xf32>
    tpu.vector_store %arg11[%c0_58, %c0_59, %c0_60, %c0_61], %111 {strides = array<i32>} : memref<1x2x8x8xf32, #tpu.memory_space<vmem>>, vector<1x2x8x8xf32>,
    return
  }
  func.func @transform_0(%arg0: i32, %arg1: i32) -> (i32, i32, i32, i32) {
    %c0_i32 = arith.constant 0 : i32
    %c0_i32_0 = arith.constant 0 : i32
    %c0_i32_1 = arith.constant 0 : i32
    return %arg0, %arg1, %c0_i32, %c0_i32_0 : i32, i32, i32, i32
  }
  func.func @transform_1(%arg0: i32, %arg1: i32) -> (i32, i32, i32, i32) {
    %c1_i32 = arith.constant 1 : i32
    %0 = arith.muli %arg1, %c1_i32 : i32
    %c1_i32_0 = arith.constant 1 : i32
    %1 = arith.subi %0, %c1_i32_0 : i32
    %c0_i32 = arith.constant 0 : i32
    %2 = arith.maxsi %1, %c0_i32 : i32
    %c0_i32_1 = arith.constant 0 : i32
    %c0_i32_2 = arith.constant 0 : i32
    %c0_i32_3 = arith.constant 0 : i32
    return %arg0, %2, %c0_i32_1, %c0_i32_2 : i32, i32, i32, i32
  }
  func.func @transform_2(%arg0: i32, %arg1: i32) -> (i32, i32, i32, i32) {
    %c1_i32 = arith.constant 1 : i32
    %0 = arith.addi %arg1, %c1_i32 : i32
    %c1_i32_0 = arith.constant 1 : i32
    %1 = arith.muli %0, %c1_i32_0 : i32
    %c3_i32 = arith.constant 3 : i32
    %2 = arith.minsi %1, %c3_i32 : i32
    %c0_i32 = arith.constant 0 : i32
    %c0_i32_1 = arith.constant 0 : i32
    %c0_i32_2 = arith.constant 0 : i32
    return %arg0, %2, %c0_i32, %c0_i32_1 : i32, i32, i32, i32
  }
  func.func @transform_3(%arg0: i32, %arg1: i32) -> (i32, i32, i32) {
    %c0_i32 = arith.constant 0 : i32
    %c0_i32_0 = arith.constant 0 : i32
    %c0_i32_1 = arith.constant 0 : i32
    %c0_i32_2 = arith.constant 0 : i32
    return %c0_i32, %c0_i32_0, %c0_i32_1 : i32, i32, i32
  }
  func.func @transform_4(%arg0: i32, %arg1: i32) -> (i32, i32) {
    %c0_i32 = arith.constant 0 : i32
    %c0_i32_0 = arith.constant 0 : i32
    %c0_i32_1 = arith.constant 0 : i32
    return %c0_i32, %c0_i32_0 : i32, i32
  }
  func.func @transform_5(%arg0: i32, %arg1: i32) -> (i32, i32) {
    %c0_i32 = arith.constant 0 : i32
    %c0_i32_0 = arith.constant 0 : i32
    %c0_i32_1 = arith.constant 0 : i32
    return %c0_i32, %c0_i32_0 : i32, i32
  }
  func.func @transform_6(%arg0: i32, %arg1: i32) -> (i32, i32, i32) {
    %c0_i32 = arith.constant 0 : i32
    %c0_i32_0 = arith.constant 0 : i32
    %c0_i32_1 = arith.constant 0 : i32
    %c0_i32_2 = arith.constant 0 : i32
    return %c0_i32, %c0_i32_0, %c0_i32_1 : i32, i32, i32
  }
  func.func @transform_7(%arg0: i32, %arg1: i32) -> (i32, i32) {
    %c0_i32 = arith.constant 0 : i32
    %c0_i32_0 = arith.constant 0 : i32
    %c0_i32_1 = arith.constant 0 : i32
    return %c0_i32, %c0_i32_0 : i32, i32
  }
  func.func @transform_8(%arg0: i32, %arg1: i32) -> (i32, i32) {
    %c0_i32 = arith.constant 0 : i32
    %c0_i32_0 = arith.constant 0 : i32
    %c0_i32_1 = arith.constant 0 : i32
    return %c0_i32, %c0_i32_0 : i32, i32
  }
  func.func @transform_9(%arg0: i32, %arg1: i32) -> (i32, i32, i32, i32) {
    %c0_i32 = arith.constant 0 : i32
    %c0_i32_0 = arith.constant 0 : i32
    %c0_i32_1 = arith.constant 0 : i32
    return %arg0, %arg1, %c0_i32, %c0_i32_0 : i32, i32, i32, i32
  }
}

</mosaic_0001>

<llo_original>
// kernel: down_forward.1
$region0: #{down_forward.1}
  #allocation0 [shape = 'u32[]', space=smem, size = 0x4, offset = 0x4, fixed_abs, tag = 'smem constant byte address 0x4 - core index']
  #allocation1 [shape = 'u32[144,128]{1,0:T(1,128)}', space=vmem, size = 0x12000, scoped, tag = 'internal scratch']
  %s0 = inlined_call_operand.vmem [shape: f32[2,16,16,4], index: 0, kind: input, shape index: {}, may-alias: {0,1,2}]
  %s1 = inlined_call_operand.vmem [shape: f32[2,16,16,4], index: 1, kind: input, shape index: {}, may-alias: {0,1,2}]
  %s2 = inlined_call_operand.vmem [shape: f32[2,16,16,4], index: 2, kind: input, shape index: {}, may-alias: {0,1,2}]
  %s3 = inlined_call_operand.vmem [shape: bf16[3,12,8], index: 3, kind: input, shape index: {}]
  %s4 = inlined_call_operand.vmem [shape: f32[1,8], index: 4, kind: input, shape index: {}]
  %s5 = inlined_call_operand.vmem [shape: f32[1,8], index: 5, kind: input, shape index: {}]
  %s6 = inlined_call_operand.vmem [shape: bf16[3,24,8], index: 6, kind: input, shape index: {}]
  %s7 = inlined_call_operand.vmem [shape: f32[1,8], index: 7, kind: input, shape index: {}]
  %s8 = inlined_call_operand.vmem [shape: f32[1,8], index: 8, kind: input, shape index: {}]
  %s9 = inlined_call_operand.vmem [shape: f32[2,8,8,8], index: 9, kind: output, shape index: {}]
  %s10 = sld [smem:[#allocation0]]
  $region69: #{down_forward.1} parent=0
    _
  %s12 = ssub.s32 1, %s10
  %s13 = scalar_select 0, %s12, %s10
  loop: start=0, step=1, limit=10
  $region2: #{down_forward.1} parent=0 // loop_pre_header
    _
  $region3: #{down_forward.1} parent=0 // loop_header
    %s15 = sphi 0, %s19
    %p16 = scmp.ge.s32.totalorder %s15, 10
    %s22 = sphi 0, %s34
    %s23 = sphi 0, %s30
    %s24 = sphi 0, %s22
    %s25 = sphi 0, %s23
    %s26 = sphi 0, %s24
    %s27 = sphi 0, %s25
    %s39 = sphi 0, %s41
    %s42 = sphi 0, %s39
    %s43 = sphi 0, %s42
    %s59 = sphi 0, %s43
    %s73 = sphi 0, %s75
    %s76 = sphi 0, %s73
    %s77 = sphi 0, %s76
    %s93 = sphi 0, %s77
    %s107 = sphi 0, %s109
    %s110 = sphi 0, %s107
    %s111 = sphi 0, %s110
    %s127 = sphi 0, %s111
    %s131 = sphi 0, %s131
    %s133 = sphi 0, %s131
    %s134 = sphi 0, %s133
    %s148 = sphi 0, %s134
    %s152 = sphi 0, %s152
    %s154 = sphi 0, %s152
    %s155 = sphi 0, %s154
    %s169 = sphi 0, %s155
    %s173 = sphi 0, %s173
    %s175 = sphi 0, %s173
    %s176 = sphi 0, %s175
    %s190 = sphi 0, %s176
    %s194 = sphi 0, %s194
    %s196 = sphi 0, %s194
    %s197 = sphi 0, %s196
    %s211 = sphi 0, %s197
    %s215 = sphi 0, %s215
    %s217 = sphi 0, %s215
    %s218 = sphi 0, %s217
    %s232 = sphi 0, %s218
    %s236 = sphi 0, %s236
    %s238 = sphi 0, %s236
    %s239 = sphi 0, %s238
    %s253 = sphi 0, %s239
    %s261 = sphi 0, %s263
    %s264 = sphi 0, %s261
    %s265 = sphi 0, %s264
    %s281 = sphi 0, %s265
  $region4: #{down_forward.1} parent=0 // loop_header_branch
    %18 = sbr.rel (%p16) target = $region8
  $region5: #{down_forward.1} parent=0 // loop_body
    %s20 = ssub.s32 %s15, 1
    %s21 = ssub.s32 %s15, 2
    %s28 = sadd.s32 1, %s23
    %p29 = scmp.ge.s32.totalorder %s28, 4
    %s30 = scalar_select %p29, 0, %s28
    %s31 = sadd.s32 1, %s22
    %s32 = scalar_select %p29, %s31, %s22
    %p33 = scmp.ge.s32.totalorder %s32, 2
    %s34 = scalar_select %p33, 0, %s32
    %s35 = ssub.s32 %s22, %s34
    %s36 = ssub.s32 %s23, %s30
    %s37 = sor.u32 %s35, %s36
    %p38 = scmp.eq.s32.totalorder %s37, 0
    %s40 = sadd.s32 %s39, 1
    %s41 = scalar_select %p38, %s39, %s40
    %p44 = pneg %p38
    %p45 = scmp.eq.s32.totalorder %s15, 7
    %p46 = por %p44, %p45
    %p47 = scmp.ne.s32.totalorder %s39, %s42
    %p48 = scmp.eq.s32.totalorder %s15, 0
    %p49 = por %p47, %p48
    %p50 = scmp.ne.s32.totalorder %s39, %s42
    %p51 = scmp.eq.s32.totalorder %s20, 7
    %p52 = por %p50, %p51
    %p53 = scmp.ne.s32.totalorder %s42, %s43
    %p54 = scmp.eq.s32.totalorder %s20, 0
    %p55 = por %p53, %p54
    %p56 = scmp.ne.s32.totalorder %s42, %s43
    %p57 = scmp.eq.s32.totalorder %s21, 7
    %p58 = por %p56, %p57
    %p60 = scmp.ne.s32.totalorder %s43, %s59
    %p61 = scmp.eq.s32.totalorder %s21, 0
    %p62 = por %p60, %p61
    %s63 = ssub.s32 %s23, 1
    %p64 = scmp.gt.s32.totalorder %s63, 0
    %s65 = scalar_select %p64, %s63, 0
    %s66 = ssub.s32 %s30, 1
    %p67 = scmp.gt.s32.totalorder %s66, 0
    %s68 = scalar_select %p67, %s66, 0
    %s69 = ssub.s32 %s22, %s34
    %s70 = ssub.s32 %s65, %s68
    %s71 = sor.u32 %s69, %s70
    %p72 = scmp.eq.s32.totalorder %s71, 0
    %s74 = sadd.s32 %s73, 1
    %s75 = scalar_select %p72, %s73, %s74
    %p78 = pneg %p72
    %p79 = scmp.eq.s32.totalorder %s15, 7
    %p80 = por %p78, %p79
    %p81 = scmp.ne.s32.totalorder %s73, %s76
    %p82 = scmp.eq.s32.totalorder %s15, 0
    %p83 = por %p81, %p82
    %p84 = scmp.ne.s32.totalorder %s73, %s76
    %p85 = scmp.eq.s32.totalorder %s20, 7
    %p86 = por %p84, %p85
    %p87 = scmp.ne.s32.totalorder %s76, %s77
    %p88 = scmp.eq.s32.totalorder %s20, 0
    %p89 = por %p87, %p88
    %p90 = scmp.ne.s32.totalorder %s76, %s77
    %p91 = scmp.eq.s32.totalorder %s21, 7
    %p92 = por %p90, %p91
    %p94 = scmp.ne.s32.totalorder %s77, %s93
    %p95 = scmp.eq.s32.totalorder %s21, 0
    %p96 = por %p94, %p95
    %s97 = sadd.s32 %s23, 1
    %p98 = scmp.lt.s32.totalorder %s97, 3
    %s99 = scalar_select %p98, %s97, 3
    %s100 = sadd.s32 %s30, 1
    %p101 = scmp.lt.s32.totalorder %s100, 3
    %s102 = scalar_select %p101, %s100, 3
    %s103 = ssub.s32 %s22, %s34
    %s104 = ssub.s32 %s99, %s102
    %s105 = sor.u32 %s103, %s104
    %p106 = scmp.eq.s32.totalorder %s105, 0
    %s108 = sadd.s32 %s107, 1
    %s109 = scalar_select %p106, %s107, %s108
    %p112 = pneg %p106
    %p113 = scmp.eq.s32.totalorder %s15, 7
    %p114 = por %p112, %p113
    %p115 = scmp.ne.s32.totalorder %s107, %s110
    %p116 = scmp.eq.s32.totalorder %s15, 0
    %p117 = por %p115, %p116
    %p118 = scmp.ne.s32.totalorder %s107, %s110
    %p119 = scmp.eq.s32.totalorder %s20, 7
    %p120 = por %p118, %p119
    %p121 = scmp.ne.s32.totalorder %s110, %s111
    %p122 = scmp.eq.s32.totalorder %s20, 0
    %p123 = por %p121, %p122
    %p124 = scmp.ne.s32.totalorder %s110, %s111
    %p125 = scmp.eq.s32.totalorder %s21, 7
    %p126 = por %p124, %p125
    %p128 = scmp.ne.s32.totalorder %s111, %s127
    %p129 = scmp.eq.s32.totalorder %s21, 0
    %p130 = por %p128, %p129
    %s132 = sadd.s32 %s131, 1
    %p135 = scmp.eq.s32.totalorder %s15, 7
    %p136 = scmp.ne.s32.totalorder %s131, %s133
    %p137 = scmp.eq.s32.totalorder %s15, 0
    %p138 = por %p136, %p137
    %p139 = scmp.ne.s32.totalorder %s131, %s133
    %p140 = scmp.eq.s32.totalorder %s20, 7
    %p141 = por %p139, %p140
    %p142 = scmp.ne.s32.totalorder %s133, %s134
    %p143 = scmp.eq.s32.totalorder %s20, 0
    %p144 = por %p142, %p143
    %p145 = scmp.ne.s32.totalorder %s133, %s134
    %p146 = scmp.eq.s32.totalorder %s21, 7
    %p147 = por %p145, %p146
    %p149 = scmp.ne.s32.totalorder %s134, %s148
    %p150 = scmp.eq.s32.totalorder %s21, 0
    %p151 = por %p149, %p150
    %s153 = sadd.s32 %s152, 1
    %p156 = scmp.eq.s32.totalorder %s15, 7
    %p157 = scmp.ne.s32.totalorder %s152, %s154
    %p158 = scmp.eq.s32.totalorder %s15, 0
    %p159 = por %p157, %p158
    %p160 = scmp.ne.s32.totalorder %s152, %s154
    %p161 = scmp.eq.s32.totalorder %s20, 7
    %p162 = por %p160, %p161
    %p163 = scmp.ne.s32.totalorder %s154, %s155
    %p164 = scmp.eq.s32.totalorder %s20, 0
    %p165 = por %p163, %p164
    %p166 = scmp.ne.s32.totalorder %s154, %s155
    %p167 = scmp.eq.s32.totalorder %s21, 7
    %p168 = por %p166, %p167
    %p170 = scmp.ne.s32.totalorder %s155, %s169
    %p171 = scmp.eq.s32.totalorder %s21, 0
    %p172 = por %p170, %p171
    %s174 = sadd.s32 %s173, 1
    %p177 = scmp.eq.s32.totalorder %s15, 7
    %p178 = scmp.ne.s32.totalorder %s173, %s175
    %p179 = scmp.eq.s32.totalorder %s15, 0
    %p180 = por %p178, %p179
    %p181 = scmp.ne.s32.totalorder %s173, %s175
    %p182 = scmp.eq.s32.totalorder %s20, 7
    %p183 = por %p181, %p182
    %p184 = scmp.ne.s32.totalorder %s175, %s176
    %p185 = scmp.eq.s32.totalorder %s20, 0
    %p186 = por %p184, %p185
    %p187 = scmp.ne.s32.totalorder %s175, %s176
    %p188 = scmp.eq.s32.totalorder %s21, 7
    %p189 = por %p187, %p188
    %p191 = scmp.ne.s32.totalorder %s176, %s190
    %p192 = scmp.eq.s32.totalorder %s21, 0
    %p193 = por %p191, %p192
    %s195 = sadd.s32 %s194, 1
    %p198 = scmp.eq.s32.totalorder %s15, 7
    %p199 = scmp.ne.s32.totalorder %s194, %s196
    %p200 = scmp.eq.s32.totalorder %s15, 0
    %p201 = por %p199, %p200
    %p202 = scmp.ne.s32.totalorder %s194, %s196
    %p203 = scmp.eq.s32.totalorder %s20, 7
    %p204 = por %p202, %p203
    %p205 = scmp.ne.s32.totalorder %s196, %s197
    %p206 = scmp.eq.s32.totalorder %s20, 0
    %p207 = por %p205, %p206
    %p208 = scmp.ne.s32.totalorder %s196, %s197
    %p209 = scmp.eq.s32.totalorder %s21, 7
    %p210 = por %p208, %p209
    %p212 = scmp.ne.s32.totalorder %s197, %s211
    %p213 = scmp.eq.s32.totalorder %s21, 0
    %p214 = por %p212, %p213
    %s216 = sadd.s32 %s215, 1
    %p219 = scmp.eq.s32.totalorder %s15, 7
    %p220 = scmp.ne.s32.totalorder %s215, %s217
    %p221 = scmp.eq.s32.totalorder %s15, 0
    %p222 = por %p220, %p221
    %p223 = scmp.ne.s32.totalorder %s215, %s217
    %p224 = scmp.eq.s32.totalorder %s20, 7
    %p225 = por %p223, %p224
    %p226 = scmp.ne.s32.totalorder %s217, %s218
    %p227 = scmp.eq.s32.totalorder %s20, 0
    %p228 = por %p226, %p227
    %p229 = scmp.ne.s32.totalorder %s217, %s218
    %p230 = scmp.eq.s32.totalorder %s21, 7
    %p231 = por %p229, %p230
    %p233 = scmp.ne.s32.totalorder %s218, %s232
    %p234 = scmp.eq.s32.totalorder %s21, 0
    %p235 = por %p233, %p234
    %s237 = sadd.s32 %s236, 1
    %p240 = scmp.eq.s32.totalorder %s15, 7
    %p241 = scmp.ne.s32.totalorder %s236, %s238
    %p242 = scmp.eq.s32.totalorder %s15, 0
    %p243 = por %p241, %p242
    %p244 = scmp.ne.s32.totalorder %s236, %s238
    %p245 = scmp.eq.s32.totalorder %s20, 7
    %p246 = por %p244, %p245
    %p247 = scmp.ne.s32.totalorder %s238, %s239
    %p248 = scmp.eq.s32.totalorder %s20, 0
    %p249 = por %p247, %p248
    %p250 = scmp.ne.s32.totalorder %s238, %s239
    %p251 = scmp.eq.s32.totalorder %s21, 7
    %p252 = por %p250, %p251
    %p254 = scmp.ne.s32.totalorder %s239, %s253
    %p255 = scmp.eq.s32.totalorder %s21, 0
    %p256 = por %p254, %p255
    %s257 = ssub.s32 %s22, %s34
    %s258 = ssub.s32 %s23, %s30
    %s259 = sor.u32 %s257, %s258
    %p260 = scmp.eq.s32.totalorder %s259, 0
    %s262 = sadd.s32 %s261, 1
    %s263 = scalar_select %p260, %s261, %s262
    %p266 = pneg %p260
    %p267 = scmp.eq.s32.totalorder %s15, 7
    %p268 = por %p266, %p267
    %p269 = scmp.ne.s32.totalorder %s261, %s264
    %p270 = scmp.eq.s32.totalorder %s15, 0
    %p271 = por %p269, %p270
    %p272 = scmp.ne.s32.totalorder %s261, %s264
    %p273 = scmp.eq.s32.totalorder %s20, 7
    %p274 = por %p272, %p273
    %p275 = scmp.ne.s32.totalorder %s264, %s265
    %p276 = scmp.eq.s32.totalorder %s20, 0
    %p277 = por %p275, %p276
    %p278 = scmp.ne.s32.totalorder %s264, %s265
    %p279 = scmp.eq.s32.totalorder %s21, 7
    %p280 = por %p278, %p279
    %p282 = scmp.ne.s32.totalorder %s265, %s281
    %p283 = scmp.eq.s32.totalorder %s21, 0
    %p284 = por %p282, %p283
    %p285 = scmp.le.s32.totalorder 1, %s15
    %p286 = scmp.lt.s32.totalorder %s15, 9
    %p287 = pnand %p285, %p286
    %p288 = pneg %p287
    // Predicated region
    $region9: #{down_forward.1} parent=5 // pred_check
      _
    $region10: #{down_forward.1} parent=5 // pred_check_branch
      %290 = sbr.rel (%p287) target = $region12
    $region11: #{down_forward.1} parent=5 // pred_region
      %s291 = ssub.s32 %s15, 1
      // Predicated region
      $region13: #{down_forward.1} parent=11 // pred_check
        %p292 = pneg %p144
      $region14: #{down_forward.1} parent=11 // pred_check_branch
        %294 = sbr.rel (%p292) target = $region16
      $region15: #{down_forward.1} parent=11 // pred_region
        _
      $region16: #{down_forward.1} parent=11 // pred_fallthru
        _
      // Predicated region
      $region17: #{down_forward.1} parent=11 // pred_check
        %p295 = pneg %p165
      $region18: #{down_forward.1} parent=11 // pred_check_branch
        %297 = sbr.rel (%p295) target = $region20
      $region19: #{down_forward.1} parent=11 // pred_region
        _
      $region20: #{down_forward.1} parent=11 // pred_fallthru
        _
      // Predicated region
      $region21: #{down_forward.1} parent=11 // pred_check
        %p298 = pneg %p186
      $region22: #{down_forward.1} parent=11 // pred_check_branch
        %300 = sbr.rel (%p298) target = $region24
      $region23: #{down_forward.1} parent=11 // pred_region
        _
      $region24: #{down_forward.1} parent=11 // pred_fallthru
        _
      // Predicated region
      $region25: #{down_forward.1} parent=11 // pred_check
        %p301 = pneg %p207
      $region26: #{down_forward.1} parent=11 // pred_check_branch
        %303 = sbr.rel (%p301) target = $region28
      $region27: #{down_forward.1} parent=11 // pred_region
        _
      $region28: #{down_forward.1} parent=11 // pred_fallthru
        _
      // Predicated region
      $region29: #{down_forward.1} parent=11 // pred_check
        %p304 = pneg %p228
      $region30: #{down_forward.1} parent=11 // pred_check_branch
        %306 = sbr.rel (%p304) target = $region32
      $region31: #{down_forward.1} parent=11 // pred_region
        _
      $region32: #{down_forward.1} parent=11 // pred_fallthru
        _
      // Predicated region
      $region33: #{down_forward.1} parent=11 // pred_check
        %p307 = pneg %p249
      $region34: #{down_forward.1} parent=11 // pred_check_branch
        %309 = sbr.rel (%p307) target = $region36
      $region35: #{down_forward.1} parent=11 // pred_region
        _
      $region36: #{down_forward.1} parent=11 // pred_fallthru
        _
    $region12: #{down_forward.1} parent=5 // pred_fallthru
      _
    %p310 = scmp.lt.s32.totalorder %s15, 8
    // Predicated region
    $region37: #{down_forward.1} parent=5 // pred_check
      %p311 = pneg %p310
    $region38: #{down_forward.1} parent=5 // pred_check_branch
      %313 = sbr.rel (%p311) target = $region40
    $region39: #{down_forward.1} parent=5 // pred_region
      // Predicated region
      $region41: #{down_forward.1} parent=39 // pred_check
        %p314 = pneg %p49
      $region42: #{down_forward.1} parent=39 // pred_check_branch
        %316 = sbr.rel (%p314) target = $region44
      $region43: #{down_forward.1} parent=39 // pred_region
        %s317 = smul.u32 4, %s23
        %p318 = scmp.lt.s32.totalorder %s22, 1
        %s319 = scalar_select %p318, %s22, 1
        %p320 = scmp.lt.s32.totalorder %s317, 15
        %s321 = scalar_select %p320, %s317, 15
        %s322 = smul.addr %s321, 2
        %s323 = smul.addr %s319, 32
        %s324 = sadd.s32 %s322, %s323
        %s325 = smul.addr %s324, 8
        %s326 = scalar_lea.vmem %s0, %s325
        %s327 = smul.u32 4, %s23
      $region44: #{down_forward.1} parent=39 // pred_fallthru
        _
      // Predicated region
      $region45: #{down_forward.1} parent=39 // pred_check
        %p328 = pneg %p83
      $region46: #{down_forward.1} parent=39 // pred_check_branch
        %330 = sbr.rel (%p328) target = $region48
      $region47: #{down_forward.1} parent=39 // pred_region
        %s331 = ssub.s32 %s23, 1
        %p332 = scmp.gt.s32.totalorder %s331, 0
        %s333 = scalar_select %p332, %s331, 0
        %s334 = smul.u32 4, %s333
        %p335 = scmp.lt.s32.totalorder %s22, 1
        %s336 = scalar_select %p335, %s22, 1
        %p337 = scmp.lt.s32.totalorder %s334, 15
        %s338 = scalar_select %p337, %s334, 15
        %s339 = smul.addr %s338, 2
        %s340 = smul.addr %s336, 32
        %s341 = sadd.s32 %s339, %s340
        %s342 = smul.addr %s341, 8
        %s343 = scalar_lea.vmem %s1, %s342
        %s344 = ssub.s32 %s23, 1
        %p345 = scmp.gt.s32.totalorder %s344, 0
        %s346 = scalar_select %p345, %s344, 0
        %s347 = smul.u32 4, %s346
      $region48: #{down_forward.1} parent=39 // pred_fallthru
        _
      // Predicated region
      $region49: #{down_forward.1} parent=39 // pred_check
        %p348 = pneg %p117
      $region50: #{down_forward.1} parent=39 // pred_check_branch
        %350 = sbr.rel (%p348) target = $region52
      $region51: #{down_forward.1} parent=39 // pred_region
        %s351 = sadd.s32 %s23, 1
        %p352 = scmp.lt.s32.totalorder %s351, 3
        %s353 = scalar_select %p352, %s351, 3
        %s354 = smul.u32 4, %s353
        %p355 = scmp.lt.s32.totalorder %s22, 1
        %s356 = scalar_select %p355, %s22, 1
        %p357 = scmp.lt.s32.totalorder %s354, 15
        %s358 = scalar_select %p357, %s354, 15
        %s359 = smul.addr %s358, 2
        %s360 = smul.addr %s356, 32
        %s361 = sadd.s32 %s359, %s360
        %s362 = smul.addr %s361, 8
        %s363 = scalar_lea.vmem %s2, %s362
        %s364 = sadd.s32 %s23, 1
        %p365 = scmp.lt.s32.totalorder %s364, 3
        %s366 = scalar_select %p365, %s364, 3
        %s367 = smul.u32 4, %s366
      $region52: #{down_forward.1} parent=39 // pred_fallthru
        _
    $region40: #{down_forward.1} parent=5 // pred_fallthru
      _
    %p368 = scmp.le.s32.totalorder 1, %s15
    %p369 = scmp.lt.s32.totalorder %s15, 9
    %p370 = pnand %p368, %p369
    %p371 = pneg %p370
    // Predicated region
    $region53: #{down_forward.1} parent=5 // pred_check
      _
    $region54: #{down_forward.1} parent=5 // pred_check_branch
      %373 = sbr.rel (%p370) target = $region56
    $region55: #{down_forward.1} parent=5 // pred_region
      %s374 = ssub.s32 %s15, 1
      %s375 = smul.u32 4, %s25
      %p376 = scmp.lt.s32.totalorder %s24, 1
      %s377 = scalar_select %p376, %s24, 1
      %p378 = scmp.lt.s32.totalorder %s375, 15
      %s379 = scalar_select %p378, %s375, 15
      %s380 = smul.addr %s379, 2
      %s381 = smul.addr %s377, 32
      %s382 = sadd.s32 %s380, %s381
      %s383 = smul.addr %s382, 8
      %s384 = scalar_lea.vmem %s0, %s383
      %p385 = pneg %p55
      %p386 = pneg %p52
      %s387 = ssub.s32 %s25, 1
      %p388 = scmp.gt.s32.totalorder %s387, 0
      %s389 = scalar_select %p388, %s387, 0
      %s390 = smul.u32 4, %s389
      %p391 = scmp.lt.s32.totalorder %s24, 1
      %s392 = scalar_select %p391, %s24, 1
      %p393 = scmp.lt.s32.totalorder %s390, 15
      %s394 = scalar_select %p393, %s390, 15
      %s395 = smul.addr %s394, 2
      %s396 = smul.addr %s392, 32
      %s397 = sadd.s32 %s395, %s396
      %s398 = smul.addr %s397, 8
      %s399 = scalar_lea.vmem %s1, %s398
      %p400 = pneg %p89
      %p401 = pneg %p86
      %s402 = sadd.s32 %s25, 1
      %p403 = scmp.lt.s32.totalorder %s402, 3
      %s404 = scalar_select %p403, %s402, 3
      %s405 = smul.u32 4, %s404
      %p406 = scmp.lt.s32.totalorder %s24, 1
      %s407 = scalar_select %p406, %s24, 1
      %p408 = scmp.lt.s32.totalorder %s405, 15
      %s409 = scalar_select %p408, %s405, 15
      %s410 = smul.addr %s409, 2
      %s411 = smul.addr %s407, 32
      %s412 = sadd.s32 %s410, %s411
      %s413 = smul.addr %s412, 8
      %s414 = scalar_lea.vmem %s2, %s413
      %p415 = pneg %p123
      %p416 = pneg %p120
      %p417 = pneg %p144
      %p418 = pneg %p141
      %p419 = pneg %p165
      %p420 = pneg %p162
      %p421 = pneg %p186
      %p422 = pneg %p183
      %p423 = pneg %p207
      %p424 = pneg %p204
      %p425 = pneg %p228
      %p426 = pneg %p225
      %p427 = pneg %p249
      %p428 = pneg %p246
      %p429 = pneg %p277
      %p430 = pneg %p274
      %s431 = smul.u32 2, %s25
      %p432 = scmp.lt.s32.totalorder %s24, 1
      %s433 = scalar_select %p432, %s24, 1
      %p434 = scmp.lt.s32.totalorder %s431, 7
      %s435 = scalar_select %p434, %s431, 7
      %s436 = smul.addr %s433, 8
      %s437 = sadd.s32 %s435, %s436
      %s438 = smul.addr %s437, 8
      %s439 = scalar_lea.vmem %s9, %s438
      %s440 = smul.u32 4, %s25
      %p441 = scmp.lt.s32.totalorder %s24, 1
      %s442 = scalar_select %p441, %s24, 1
      %p443 = scmp.lt.s32.totalorder %s440, 15
      %s444 = scalar_select %p443, %s440, 15
      %s445 = smul.addr %s444, 2
      %s446 = smul.addr %s442, 32
      %s447 = sadd.s32 %s445, %s446
      %s448 = smul.addr %s447, 8
      %s449 = scalar_lea.vmem %s0, %s448
      %s450 = smul.u32 4, %s25
      %s451 = ssub.s32 %s25, 1
      %p452 = scmp.gt.s32.totalorder %s451, 0
      %s453 = scalar_select %p452, %s451, 0
      %s454 = smul.u32 4, %s453
      %p455 = scmp.lt.s32.totalorder %s24, 1
      %s456 = scalar_select %p455, %s24, 1
      %p457 = scmp.lt.s32.totalorder %s454, 15
      %s458 = scalar_select %p457, %s454, 15
      %s459 = smul.addr %s458, 2
      %s460 = smul.addr %s456, 32
      %s461 = sadd.s32 %s459, %s460
      %s462 = smul.addr %s461, 8
      %s463 = scalar_lea.vmem %s1, %s462
      %s464 = ssub.s32 %s25, 1
      %p465 = scmp.gt.s32.totalorder %s464, 0
      %s466 = scalar_select %p465, %s464, 0
      %s467 = smul.u32 4, %s466
      %s468 = sadd.s32 %s25, 1
      %p469 = scmp.lt.s32.totalorder %s468, 3
      %s470 = scalar_select %p469, %s468, 3
      %s471 = smul.u32 4, %s470
      %p472 = scmp.lt.s32.totalorder %s24, 1
      %s473 = scalar_select %p472, %s24, 1
      %p474 = scmp.lt.s32.totalorder %s471, 15
      %s475 = scalar_select %p474, %s471, 15
      %s476 = smul.addr %s475, 2
      %s477 = smul.addr %s473, 32
      %s478 = sadd.s32 %s476, %s477
      %s479 = smul.addr %s478, 8
      %s480 = scalar_lea.vmem %s2, %s479
      %s481 = sadd.s32 %s25, 1
      %p482 = scmp.lt.s32.totalorder %s481, 3
      %s483 = scalar_select %p482, %s481, 3
      %s484 = smul.u32 4, %s483
      %s485 = smul.u32 2, %s25
      %p486 = scmp.lt.s32.totalorder %s24, 1
      %s487 = scalar_select %p486, %s24, 1
      %p488 = scmp.lt.s32.totalorder %s485, 7
      %s489 = scalar_select %p488, %s485, 7
      %s490 = smul.addr %s487, 8
      %s491 = sadd.s32 %s489, %s490
      %s492 = smul.addr %s491, 8
      %s493 = scalar_lea.vmem %s9, %s492
      %s494 = smul.u32 2, %s25
      %v496 = vld [vmem:[%s463] sm:$0xff]
      %v497 = vld [vmem:[%s463 + $0x8] sm:$0xff]
      %v498 = vld [vmem:[%s463 + $0x10] sm:$0xff]
      %v499 = vld [vmem:[%s463 + $0x18] sm:$0xff]
      %v500 = vld [vmem:[%s463 + $0x20] sm:$0xff]
      %v501 = vld [vmem:[%s463 + $0x28] sm:$0xff]
      %v502 = vld [vmem:[%s463 + $0x30] sm:$0xff]
      %v503 = vld [vmem:[%s463 + $0x38] sm:$0xff]
      %vm504 = vcmask 31744
      %v505 = vsel %vm504, %v496, -inf
      %v506 = vsel %vm504, %v498, -inf
      %v507 = vmax.f32 %v505, %v506
      %v508 = vsel %vm504, %v497, -inf
      %v509 = vsel %vm504, %v499, -inf
      %v510 = vmax.f32 %v508, %v509
      %v511 = vsel %vm504, %v500, -inf
      %v512 = vsel %vm504, %v502, -inf
      %v513 = vmax.f32 %v511, %v512
      %v514 = vsel %vm504, %v501, -inf
      %v515 = vsel %vm504, %v503, -inf
      %v516 = vmax.f32 %v514, %v515
      %v521 = vcombine.high %v507, %v507
      %v523 = vunpack.c.l.s4 1983009808
      %v524 = vunpack.c.0.s8 %v523
      %v525 = vlaneseq
      %v526 = vshrl.u32 %v525, 7
      %v527 = vsub.s32 %v524, %v526
      %v528 = vrot.slane %v507, %v527
      %v530 = vunpack.c.l.s4 1983009808
      %v531 = vunpack.c.0.s8 %v530
      %v532 = vlaneseq
      %v533 = vshrl.u32 %v532, 7
      %v534 = vsub.s32 %v531, %v533
      %v535 = vrot.slane %v521, %v534
      %v536 = vcombine.high %v528, %v528
      %v537 = vcombine.high %v535, %v535
      %v538 = vcombine.high %v510, %v510
      %v540 = vunpack.c.l.s4 1983009808
      %v541 = vunpack.c.0.s8 %v540
      %v542 = vlaneseq
      %v543 = vshrl.u32 %v542, 7
      %v544 = vsub.s32 %v541, %v543
      %v545 = vrot.slane %v510, %v544
      %v547 = vunpack.c.l.s4 1983009808
      %v548 = vunpack.c.0.s8 %v547
      %v549 = vlaneseq
      %v550 = vshrl.u32 %v549, 7
      %v551 = vsub.s32 %v548, %v550
      %v552 = vrot.slane %v538, %v551
      %v553 = vcombine.high %v545, %v545
      %v554 = vcombine.high %v552, %v552
      %v555 = vcombine.high %v513, %v513
      %v557 = vunpack.c.l.s4 1983009808
      %v558 = vunpack.c.0.s8 %v557
      %v559 = vlaneseq
      %v560 = vshrl.u32 %v559, 7
      %v561 = vsub.s32 %v558, %v560
      %v562 = vrot.slane %v513, %v561
      %v564 = vunpack.c.l.s4 1983009808
      %v565 = vunpack.c.0.s8 %v564
      %v566 = vlaneseq
      %v567 = vshrl.u32 %v566, 7
      %v568 = vsub.s32 %v565, %v567
      %v569 = vrot.slane %v555, %v568
      %v570 = vcombine.high %v562, %v562
      %v571 = vcombine.high %v569, %v569
      %v572 = vcombine.high %v516, %v516
      %v574 = vunpack.c.l.s4 1983009808
      %v575 = vunpack.c.0.s8 %v574
      %v576 = vlaneseq
      %v577 = vshrl.u32 %v576, 7
      %v578 = vsub.s32 %v575, %v577
      %v579 = vrot.slane %v516, %v578
      %v581 = vunpack.c.l.s4 1983009808
      %v582 = vunpack.c.0.s8 %v581
      %v583 = vlaneseq
      %v584 = vshrl.u32 %v583, 7
      %v585 = vsub.s32 %v582, %v584
      %v586 = vrot.slane %v572, %v585
      %v587 = vcombine.high %v579, %v579
      %v588 = vcombine.high %v586, %v586
      %vm605 = vcmask 25600
      %v606 = vsel %vm605, %v528, -inf
      %v607 = vrot.slane %v606, 4
      %v608 = vmax.f32 %v606, %v607
      %v609 = vrot.slane %v608, 2
      %v610 = vmax.f32 %v608, %v609
      %v611 = vrot.slane %v610, 1
      %v612 = vmax.f32 %v610, %v611
      %v613 = vsel %vm605, %v536, -inf
      %v614 = vrot.slane %v613, 4
      %v615 = vmax.f32 %v613, %v614
      %v616 = vrot.slane %v615, 2
      %v617 = vmax.f32 %v615, %v616
      %v618 = vrot.slane %v617, 1
      %v619 = vmax.f32 %v617, %v618
      %v620 = vsel %vm605, %v535, -inf
      %v621 = vrot.slane %v620, 4
      %v622 = vmax.f32 %v620, %v621
      %v623 = vrot.slane %v622, 2
      %v624 = vmax.f32 %v622, %v623
      %v625 = vrot.slane %v624, 1
      %v626 = vmax.f32 %v624, %v625
      %v627 = vsel %vm605, %v537, -inf
      %v628 = vrot.slane %v627, 4
      %v629 = vmax.f32 %v627, %v628
      %v630 = vrot.slane %v629, 2
      %v631 = vmax.f32 %v629, %v630
      %v632 = vrot.slane %v631, 1
      %v633 = vmax.f32 %v631, %v632
      %v634 = vsel %vm605, %v545, -inf
      %v635 = vrot.slane %v634, 4
      %v636 = vmax.f32 %v634, %v635
      %v637 = vrot.slane %v636, 2
      %v638 = vmax.f32 %v636, %v637
      %v639 = vrot.slane %v638, 1
      %v640 = vmax.f32 %v638, %v639
      %v641 = vsel %vm605, %v553, -inf
      %v642 = vrot.slane %v641, 4
      %v643 = vmax.f32 %v641, %v642
      %v644 = vrot.slane %v643, 2
      %v645 = vmax.f32 %v643, %v644
      %v646 = vrot.slane %v645, 1
      %v647 = vmax.f32 %v645, %v646
      %v648 = vsel %vm605, %v552, -inf
      %v649 = vrot.slane %v648, 4
      %v650 = vmax.f32 %v648, %v649
      %v651 = vrot.slane %v650, 2
      %v652 = vmax.f32 %v650, %v651
      %v653 = vrot.slane %v652, 1
      %v654 = vmax.f32 %v652, %v653
      %v655 = vsel %vm605, %v554, -inf
      %v656 = vrot.slane %v655, 4
      %v657 = vmax.f32 %v655, %v656
      %v658 = vrot.slane %v657, 2
      %v659 = vmax.f32 %v657, %v658
      %v660 = vrot.slane %v659, 1
      %v661 = vmax.f32 %v659, %v660
      %v662 = vsel %vm605, %v562, -inf
      %v663 = vrot.slane %v662, 4
      %v664 = vmax.f32 %v662, %v663
      %v665 = vrot.slane %v664, 2
      %v666 = vmax.f32 %v664, %v665
      %v667 = vrot.slane %v666, 1
      %v668 = vmax.f32 %v666, %v667
      %v669 = vsel %vm605, %v570, -inf
      %v670 = vrot.slane %v669, 4
      %v671 = vmax.f32 %v669, %v670
      %v672 = vrot.slane %v671, 2
      %v673 = vmax.f32 %v671, %v672
      %v674 = vrot.slane %v673, 1
      %v675 = vmax.f32 %v673, %v674
      %v676 = vsel %vm605, %v569, -inf
      %v677 = vrot.slane %v676, 4
      %v678 = vmax.f32 %v676, %v677
      %v679 = vrot.slane %v678, 2
      %v680 = vmax.f32 %v678, %v679
      %v681 = vrot.slane %v680, 1
      %v682 = vmax.f32 %v680, %v681
      %v683 = vsel %vm605, %v571, -inf
      %v684 = vrot.slane %v683, 4
      %v685 = vmax.f32 %v683, %v684
      %v686 = vrot.slane %v685, 2
      %v687 = vmax.f32 %v685, %v686
      %v688 = vrot.slane %v687, 1
      %v689 = vmax.f32 %v687, %v688
      %v690 = vsel %vm605, %v579, -inf
      %v691 = vrot.slane %v690, 4
      %v692 = vmax.f32 %v690, %v691
      %v693 = vrot.slane %v692, 2
      %v694 = vmax.f32 %v692, %v693
      %v695 = vrot.slane %v694, 1
      %v696 = vmax.f32 %v694, %v695
      %v697 = vsel %vm605, %v587, -inf
      %v698 = vrot.slane %v697, 4
      %v699 = vmax.f32 %v697, %v698
      %v700 = vrot.slane %v699, 2
      %v701 = vmax.f32 %v699, %v700
      %v702 = vrot.slane %v701, 1
      %v703 = vmax.f32 %v701, %v702
      %v704 = vsel %vm605, %v586, -inf
      %v705 = vrot.slane %v704, 4
      %v706 = vmax.f32 %v704, %v705
      %v707 = vrot.slane %v706, 2
      %v708 = vmax.f32 %v706, %v707
      %v709 = vrot.slane %v708, 1
      %v710 = vmax.f32 %v708, %v709
      %v711 = vsel %vm605, %v588, -inf
      %v712 = vrot.slane %v711, 4
      %v713 = vmax.f32 %v711, %v712
      %v714 = vrot.slane %v713, 2
      %v715 = vmax.f32 %v713, %v714
      %v716 = vrot.slane %v715, 1
      %v717 = vmax.f32 %v715, %v716
      %v718 = vld [vmem:[%s449] sm:$0xff]
      %v719 = vld [vmem:[%s449 + $0x8] sm:$0xff]
      %v720 = vld [vmem:[%s449 + $0x10] sm:$0xff]
      %v721 = vld [vmem:[%s449 + $0x18] sm:$0xff]
      %v722 = vld [vmem:[%s449 + $0x20] sm:$0xff]
      %v723 = vld [vmem:[%s449 + $0x28] sm:$0xff]
      %v724 = vld [vmem:[%s449 + $0x30] sm:$0xff]
      %v725 = vld [vmem:[%s449 + $0x38] sm:$0xff]
      %v726 = vsel %vm504, %v718, -inf
      %v727 = vsel %vm504, %v720, -inf
      %v728 = vmax.f32 %v726, %v727
      %v729 = vsel %vm504, %v719, -inf
      %v730 = vsel %vm504, %v721, -inf
      %v731 = vmax.f32 %v729, %v730
      %v732 = vsel %vm504, %v722, -inf
      %v733 = vsel %vm504, %v724, -inf
      %v734 = vmax.f32 %v732, %v733
      %v735 = vsel %vm504, %v723, -inf
      %v736 = vsel %vm504, %v725, -inf
      %v737 = vmax.f32 %v735, %v736
      %v742 = vcombine.high %v728, %v728
      %v744 = vunpack.c.l.s4 1983009808
      %v745 = vunpack.c.0.s8 %v744
      %v746 = vlaneseq
      %v747 = vshrl.u32 %v746, 7
      %v748 = vsub.s32 %v745, %v747
      %v749 = vrot.slane %v728, %v748
      %v751 = vunpack.c.l.s4 1983009808
      %v752 = vunpack.c.0.s8 %v751
      %v753 = vlaneseq
      %v754 = vshrl.u32 %v753, 7
      %v755 = vsub.s32 %v752, %v754
      %v756 = vrot.slane %v742, %v755
      %v757 = vcombine.high %v749, %v749
      %v758 = vcombine.high %v756, %v756
      %v759 = vcombine.high %v731, %v731
      %v761 = vunpack.c.l.s4 1983009808
      %v762 = vunpack.c.0.s8 %v761
      %v763 = vlaneseq
      %v764 = vshrl.u32 %v763, 7
      %v765 = vsub.s32 %v762, %v764
      %v766 = vrot.slane %v731, %v765
      %v768 = vunpack.c.l.s4 1983009808
      %v769 = vunpack.c.0.s8 %v768
      %v770 = vlaneseq
      %v771 = vshrl.u32 %v770, 7
      %v772 = vsub.s32 %v769, %v771
      %v773 = vrot.slane %v759, %v772
      %v774 = vcombine.high %v766, %v766
      %v775 = vcombine.high %v773, %v773
      %v776 = vcombine.high %v734, %v734
      %v778 = vunpack.c.l.s4 1983009808
      %v779 = vunpack.c.0.s8 %v778
      %v780 = vlaneseq
      %v781 = vshrl.u32 %v780, 7
      %v782 = vsub.s32 %v779, %v781
      %v783 = vrot.slane %v734, %v782
      %v785 = vunpack.c.l.s4 1983009808
      %v786 = vunpack.c.0.s8 %v785
      %v787 = vlaneseq
      %v788 = vshrl.u32 %v787, 7
      %v789 = vsub.s32 %v786, %v788
      %v790 = vrot.slane %v776, %v789
      %v791 = vcombine.high %v783, %v783
      %v792 = vcombine.high %v790, %v790
      %v793 = vcombine.high %v737, %v737
      %v795 = vunpack.c.l.s4 1983009808
      %v796 = vunpack.c.0.s8 %v795
      %v797 = vlaneseq
      %v798 = vshrl.u32 %v797, 7
      %v799 = vsub.s32 %v796, %v798
      %v800 = vrot.slane %v737, %v799
      %v802 = vunpack.c.l.s4 1983009808
      %v803 = vunpack.c.0.s8 %v802
      %v804 = vlaneseq
      %v805 = vshrl.u32 %v804, 7
      %v806 = vsub.s32 %v803, %v805
      %v807 = vrot.slane %v793, %v806
      %v808 = vcombine.high %v800, %v800
      %v809 = vcombine.high %v807, %v807
      %v826 = vsel %vm605, %v749, -inf
      %v827 = vrot.slane %v826, 4
      %v828 = vmax.f32 %v826, %v827
      %v829 = vrot.slane %v828, 2
      %v830 = vmax.f32 %v828, %v829
      %v831 = vrot.slane %v830, 1
      %v832 = vmax.f32 %v830, %v831
      %v833 = vsel %vm605, %v757, -inf
      %v834 = vrot.slane %v833, 4
      %v835 = vmax.f32 %v833, %v834
      %v836 = vrot.slane %v835, 2
      %v837 = vmax.f32 %v835, %v836
      %v838 = vrot.slane %v837, 1
      %v839 = vmax.f32 %v837, %v838
      %v840 = vsel %vm605, %v756, -inf
      %v841 = vrot.slane %v840, 4
      %v842 = vmax.f32 %v840, %v841
      %v843 = vrot.slane %v842, 2
      %v844 = vmax.f32 %v842, %v843
      %v845 = vrot.slane %v844, 1
      %v846 = vmax.f32 %v844, %v845
      %v847 = vsel %vm605, %v758, -inf
      %v848 = vrot.slane %v847, 4
      %v849 = vmax.f32 %v847, %v848
      %v850 = vrot.slane %v849, 2
      %v851 = vmax.f32 %v849, %v850
      %v852 = vrot.slane %v851, 1
      %v853 = vmax.f32 %v851, %v852
      %v854 = vsel %vm605, %v766, -inf
      %v855 = vrot.slane %v854, 4
      %v856 = vmax.f32 %v854, %v855
      %v857 = vrot.slane %v856, 2
      %v858 = vmax.f32 %v856, %v857
      %v859 = vrot.slane %v858, 1
      %v860 = vmax.f32 %v858, %v859
      %v861 = vsel %vm605, %v774, -inf
      %v862 = vrot.slane %v861, 4
      %v863 = vmax.f32 %v861, %v862
      %v864 = vrot.slane %v863, 2
      %v865 = vmax.f32 %v863, %v864
      %v866 = vrot.slane %v865, 1
      %v867 = vmax.f32 %v865, %v866
      %v868 = vsel %vm605, %v773, -inf
      %v869 = vrot.slane %v868, 4
      %v870 = vmax.f32 %v868, %v869
      %v871 = vrot.slane %v870, 2
      %v872 = vmax.f32 %v870, %v871
      %v873 = vrot.slane %v872, 1
      %v874 = vmax.f32 %v872, %v873
      %v875 = vsel %vm605, %v775, -inf
      %v876 = vrot.slane %v875, 4
      %v877 = vmax.f32 %v875, %v876
      %v878 = vrot.slane %v877, 2
      %v879 = vmax.f32 %v877, %v878
      %v880 = vrot.slane %v879, 1
      %v881 = vmax.f32 %v879, %v880
      %v882 = vsel %vm605, %v783, -inf
      %v883 = vrot.slane %v882, 4
      %v884 = vmax.f32 %v882, %v883
      %v885 = vrot.slane %v884, 2
      %v886 = vmax.f32 %v884, %v885
      %v887 = vrot.slane %v886, 1
      %v888 = vmax.f32 %v886, %v887
      %v889 = vsel %vm605, %v791, -inf
      %v890 = vrot.slane %v889, 4
      %v891 = vmax.f32 %v889, %v890
      %v892 = vrot.slane %v891, 2
      %v893 = vmax.f32 %v891, %v892
      %v894 = vrot.slane %v893, 1
      %v895 = vmax.f32 %v893, %v894
      %v896 = vsel %vm605, %v790, -inf
      %v897 = vrot.slane %v896, 4
      %v898 = vmax.f32 %v896, %v897
      %v899 = vrot.slane %v898, 2
      %v900 = vmax.f32 %v898, %v899
      %v901 = vrot.slane %v900, 1
      %v902 = vmax.f32 %v900, %v901
      %v903 = vsel %vm605, %v792, -inf
      %v904 = vrot.slane %v903, 4
      %v905 = vmax.f32 %v903, %v904
      %v906 = vrot.slane %v905, 2
      %v907 = vmax.f32 %v905, %v906
      %v908 = vrot.slane %v907, 1
      %v909 = vmax.f32 %v907, %v908
      %v910 = vsel %vm605, %v800, -inf
      %v911 = vrot.slane %v910, 4
      %v912 = vmax.f32 %v910, %v911
      %v913 = vrot.slane %v912, 2
      %v914 = vmax.f32 %v912, %v913
      %v915 = vrot.slane %v914, 1
      %v916 = vmax.f32 %v914, %v915
      %v917 = vsel %vm605, %v808, -inf
      %v918 = vrot.slane %v917, 4
      %v919 = vmax.f32 %v917, %v918
      %v920 = vrot.slane %v919, 2
      %v921 = vmax.f32 %v919, %v920
      %v922 = vrot.slane %v921, 1
      %v923 = vmax.f32 %v921, %v922
      %v924 = vsel %vm605, %v807, -inf
      %v925 = vrot.slane %v924, 4
      %v926 = vmax.f32 %v924, %v925
      %v927 = vrot.slane %v926, 2
      %v928 = vmax.f32 %v926, %v927
      %v929 = vrot.slane %v928, 1
      %v930 = vmax.f32 %v928, %v929
      %v931 = vsel %vm605, %v809, -inf
      %v932 = vrot.slane %v931, 4
      %v933 = vmax.f32 %v931, %v932
      %v934 = vrot.slane %v933, 2
      %v935 = vmax.f32 %v933, %v934
      %v936 = vrot.slane %v935, 1
      %v937 = vmax.f32 %v935, %v936
      %v938 = vld [vmem:[%s480] sm:$0xff]
      %v939 = vld [vmem:[%s480 + $0x8] sm:$0xff]
      %v940 = vld [vmem:[%s480 + $0x10] sm:$0xff]
      %v941 = vld [vmem:[%s480 + $0x18] sm:$0xff]
      %v942 = vld [vmem:[%s480 + $0x20] sm:$0xff]
      %v943 = vld [vmem:[%s480 + $0x28] sm:$0xff]
      %v944 = vld [vmem:[%s480 + $0x30] sm:$0xff]
      %v945 = vld [vmem:[%s480 + $0x38] sm:$0xff]
      %v946 = vsel %vm504, %v938, -inf
      %v947 = vsel %vm504, %v940, -inf
      %v948 = vmax.f32 %v946, %v947
      %v949 = vsel %vm504, %v939, -inf
      %v950 = vsel %vm504, %v941, -inf
      %v951 = vmax.f32 %v949, %v950
      %v952 = vsel %vm504, %v942, -inf
      %v953 = vsel %vm504, %v944, -inf
      %v954 = vmax.f32 %v952, %v953
      %v955 = vsel %vm504, %v943, -inf
      %v956 = vsel %vm504, %v945, -inf
      %v957 = vmax.f32 %v955, %v956
      %v962 = vcombine.high %v948, %v948
      %v964 = vunpack.c.l.s4 1983009808
      %v965 = vunpack.c.0.s8 %v964
      %v966 = vlaneseq
      %v967 = vshrl.u32 %v966, 7
      %v968 = vsub.s32 %v965, %v967
      %v969 = vrot.slane %v948, %v968
      %v971 = vunpack.c.l.s4 1983009808
      %v972 = vunpack.c.0.s8 %v971
      %v973 = vlaneseq
      %v974 = vshrl.u32 %v973, 7
      %v975 = vsub.s32 %v972, %v974
      %v976 = vrot.slane %v962, %v975
      %v977 = vcombine.high %v969, %v969
      %v978 = vcombine.high %v976, %v976
      %v979 = vcombine.high %v951, %v951
      %v981 = vunpack.c.l.s4 1983009808
      %v982 = vunpack.c.0.s8 %v981
      %v983 = vlaneseq
      %v984 = vshrl.u32 %v983, 7
      %v985 = vsub.s32 %v982, %v984
      %v986 = vrot.slane %v951, %v985
      %v988 = vunpack.c.l.s4 1983009808
      %v989 = vunpack.c.0.s8 %v988
      %v990 = vlaneseq
      %v991 = vshrl.u32 %v990, 7
      %v992 = vsub.s32 %v989, %v991
      %v993 = vrot.slane %v979, %v992
      %v994 = vcombine.high %v986, %v986
      %v995 = vcombine.high %v993, %v993
      %v996 = vcombine.high %v954, %v954
      %v998 = vunpack.c.l.s4 1983009808
      %v999 = vunpack.c.0.s8 %v998
      %v1000 = vlaneseq
      %v1001 = vshrl.u32 %v1000, 7
      %v1002 = vsub.s32 %v999, %v1001
      %v1003 = vrot.slane %v954, %v1002
      %v1005 = vunpack.c.l.s4 1983009808
      %v1006 = vunpack.c.0.s8 %v1005
      %v1007 = vlaneseq
      %v1008 = vshrl.u32 %v1007, 7
      %v1009 = vsub.s32 %v1006, %v1008
      %v1010 = vrot.slane %v996, %v1009
      %v1011 = vcombine.high %v1003, %v1003
      %v1012 = vcombine.high %v1010, %v1010
      %v1013 = vcombine.high %v957, %v957
      %v1015 = vunpack.c.l.s4 1983009808
      %v1016 = vunpack.c.0.s8 %v1015
      %v1017 = vlaneseq
      %v1018 = vshrl.u32 %v1017, 7
      %v1019 = vsub.s32 %v1016, %v1018
      %v1020 = vrot.slane %v957, %v1019
      %v1022 = vunpack.c.l.s4 1983009808
      %v1023 = vunpack.c.0.s8 %v1022
      %v1024 = vlaneseq
      %v1025 = vshrl.u32 %v1024, 7
      %v1026 = vsub.s32 %v1023, %v1025
      %v1027 = vrot.slane %v1013, %v1026
      %v1028 = vcombine.high %v1020, %v1020
      %v1029 = vcombine.high %v1027, %v1027
      %v1046 = vsel %vm605, %v969, -inf
      %v1047 = vrot.slane %v1046, 4
      %v1048 = vmax.f32 %v1046, %v1047
      %v1049 = vrot.slane %v1048, 2
      %v1050 = vmax.f32 %v1048, %v1049
      %v1051 = vrot.slane %v1050, 1
      %v1052 = vmax.f32 %v1050, %v1051
      %v1053 = vsel %vm605, %v977, -inf
      %v1054 = vrot.slane %v1053, 4
      %v1055 = vmax.f32 %v1053, %v1054
      %v1056 = vrot.slane %v1055, 2
      %v1057 = vmax.f32 %v1055, %v1056
      %v1058 = vrot.slane %v1057, 1
      %v1059 = vmax.f32 %v1057, %v1058
      %v1060 = vsel %vm605, %v976, -inf
      %v1061 = vrot.slane %v1060, 4
      %v1062 = vmax.f32 %v1060, %v1061
      %v1063 = vrot.slane %v1062, 2
      %v1064 = vmax.f32 %v1062, %v1063
      %v1065 = vrot.slane %v1064, 1
      %v1066 = vmax.f32 %v1064, %v1065
      %v1067 = vsel %vm605, %v978, -inf
      %v1068 = vrot.slane %v1067, 4
      %v1069 = vmax.f32 %v1067, %v1068
      %v1070 = vrot.slane %v1069, 2
      %v1071 = vmax.f32 %v1069, %v1070
      %v1072 = vrot.slane %v1071, 1
      %v1073 = vmax.f32 %v1071, %v1072
      %v1074 = vsel %vm605, %v986, -inf
      %v1075 = vrot.slane %v1074, 4
      %v1076 = vmax.f32 %v1074, %v1075
      %v1077 = vrot.slane %v1076, 2
      %v1078 = vmax.f32 %v1076, %v1077
      %v1079 = vrot.slane %v1078, 1
      %v1080 = vmax.f32 %v1078, %v1079
      %v1081 = vsel %vm605, %v994, -inf
      %v1082 = vrot.slane %v1081, 4
      %v1083 = vmax.f32 %v1081, %v1082
      %v1084 = vrot.slane %v1083, 2
      %v1085 = vmax.f32 %v1083, %v1084
      %v1086 = vrot.slane %v1085, 1
      %v1087 = vmax.f32 %v1085, %v1086
      %v1088 = vsel %vm605, %v993, -inf
      %v1089 = vrot.slane %v1088, 4
      %v1090 = vmax.f32 %v1088, %v1089
      %v1091 = vrot.slane %v1090, 2
      %v1092 = vmax.f32 %v1090, %v1091
      %v1093 = vrot.slane %v1092, 1
      %v1094 = vmax.f32 %v1092, %v1093
      %v1095 = vsel %vm605, %v995, -inf
      %v1096 = vrot.slane %v1095, 4
      %v1097 = vmax.f32 %v1095, %v1096
      %v1098 = vrot.slane %v1097, 2
      %v1099 = vmax.f32 %v1097, %v1098
      %v1100 = vrot.slane %v1099, 1
      %v1101 = vmax.f32 %v1099, %v1100
      %v1102 = vsel %vm605, %v1003, -inf
      %v1103 = vrot.slane %v1102, 4
      %v1104 = vmax.f32 %v1102, %v1103
      %v1105 = vrot.slane %v1104, 2
      %v1106 = vmax.f32 %v1104, %v1105
      %v1107 = vrot.slane %v1106, 1
      %v1108 = vmax.f32 %v1106, %v1107
      %v1109 = vsel %vm605, %v1011, -inf
      %v1110 = vrot.slane %v1109, 4
      %v1111 = vmax.f32 %v1109, %v1110
      %v1112 = vrot.slane %v1111, 2
      %v1113 = vmax.f32 %v1111, %v1112
      %v1114 = vrot.slane %v1113, 1
      %v1115 = vmax.f32 %v1113, %v1114
      %v1116 = vsel %vm605, %v1010, -inf
      %v1117 = vrot.slane %v1116, 4
      %v1118 = vmax.f32 %v1116, %v1117
      %v1119 = vrot.slane %v1118, 2
      %v1120 = vmax.f32 %v1118, %v1119
      %v1121 = vrot.slane %v1120, 1
      %v1122 = vmax.f32 %v1120, %v1121
      %v1123 = vsel %vm605, %v1012, -inf
      %v1124 = vrot.slane %v1123, 4
      %v1125 = vmax.f32 %v1123, %v1124
      %v1126 = vrot.slane %v1125, 2
      %v1127 = vmax.f32 %v1125, %v1126
      %v1128 = vrot.slane %v1127, 1
      %v1129 = vmax.f32 %v1127, %v1128
      %v1130 = vsel %vm605, %v1020, -inf
      %v1131 = vrot.slane %v1130, 4
      %v1132 = vmax.f32 %v1130, %v1131
      %v1133 = vrot.slane %v1132, 2
      %v1134 = vmax.f32 %v1132, %v1133
      %v1135 = vrot.slane %v1134, 1
      %v1136 = vmax.f32 %v1134, %v1135
      %v1137 = vsel %vm605, %v1028, -inf
      %v1138 = vrot.slane %v1137, 4
      %v1139 = vmax.f32 %v1137, %v1138
      %v1140 = vrot.slane %v1139, 2
      %v1141 = vmax.f32 %v1139, %v1140
      %v1142 = vrot.slane %v1141, 1
      %v1143 = vmax.f32 %v1141, %v1142
      %v1144 = vsel %vm605, %v1027, -inf
      %v1145 = vrot.slane %v1144, 4
      %v1146 = vmax.f32 %v1144, %v1145
      %v1147 = vrot.slane %v1146, 2
      %v1148 = vmax.f32 %v1146, %v1147
      %v1149 = vrot.slane %v1148, 1
      %v1150 = vmax.f32 %v1148, %v1149
      %v1151 = vsel %vm605, %v1029, -inf
      %v1152 = vrot.slane %v1151, 4
      %v1153 = vmax.f32 %v1151, %v1152
      %v1154 = vrot.slane %v1153, 2
      %v1155 = vmax.f32 %v1153, %v1154
      %v1156 = vrot.slane %v1155, 1
      %v1157 = vmax.f32 %v1155, %v1156
      %s1158 = smul.u32 %s25, 2
      %s1159 = ssub.s32 %s1158, 2
      %v1160 = vstv %s1159
      %v1161 = vadd.s32 %v1160, 1
      %v1162 = vadd.s32 %v1160, 2
      %v1163 = vadd.s32 %v1160, 3
      %v1164 = vadd.s32 %v1160, 4
      %v1165 = vadd.s32 %v1160, 5
      %vm1166 = vcmp.ge.s32.totalorder %v1160, 0
      %vm1167 = vcmp.ge.s32.totalorder %v1161, 0
      %vm1168 = vcmp.ge.s32.totalorder %v1162, 0
      %vm1169 = vcmp.ge.s32.totalorder %v1163, 0
      %vm1170 = vcmp.ge.s32.totalorder %v1164, 0
      %vm1171 = vcmp.ge.s32.totalorder %v1165, 0
      %vm1172 = vcmp.lt.s32.totalorder %v1160, 8
      %vm1173 = vcmp.lt.s32.totalorder %v1161, 8
      %vm1174 = vcmp.lt.s32.totalorder %v1162, 8
      %vm1175 = vcmp.lt.s32.totalorder %v1163, 8
      %vm1176 = vcmp.lt.s32.totalorder %v1164, 8
      %vm1177 = vcmp.lt.s32.totalorder %v1165, 8
      %vm1178 = vmand %vm1166, %vm1172
      %vm1179 = vmand %vm1167, %vm1173
      %vm1180 = vmand %vm1168, %vm1174
      %vm1181 = vmand %vm1169, %vm1175
      %vm1182 = vmand %vm1170, %vm1176
      %vm1183 = vmand %vm1171, %vm1177
      %v1184 = vsel %vm1178, %v612, 0.0
      %v1185 = vsel %vm1178, %v619, 0.0
      %v1186 = vsel %vm1178, %v626, 0.0
      %v1187 = vsel %vm1178, %v633, 0.0
      %v1188 = vsel %vm1178, %v640, 0.0
      %v1189 = vsel %vm1178, %v647, 0.0
      %v1190 = vsel %vm1178, %v654, 0.0
      %v1191 = vsel %vm1178, %v661, 0.0
      %v1192 = vsel %vm1179, %v668, 0.0
      %v1193 = vsel %vm1179, %v675, 0.0
      %v1194 = vsel %vm1179, %v682, 0.0
      %v1195 = vsel %vm1179, %v689, 0.0
      %v1196 = vsel %vm1179, %v696, 0.0
      %v1197 = vsel %vm1179, %v703, 0.0
      %v1198 = vsel %vm1179, %v710, 0.0
      %v1199 = vsel %vm1179, %v717, 0.0
      %v1200 = vsel %vm1180, %v832, 0.0
      %v1201 = vsel %vm1180, %v839, 0.0
      %v1202 = vsel %vm1180, %v846, 0.0
      %v1203 = vsel %vm1180, %v853, 0.0
      %v1204 = vsel %vm1180, %v860, 0.0
      %v1205 = vsel %vm1180, %v867, 0.0
      %v1206 = vsel %vm1180, %v874, 0.0
      %v1207 = vsel %vm1180, %v881, 0.0
      %v1208 = vsel %vm1181, %v888, 0.0
      %v1209 = vsel %vm1181, %v895, 0.0
      %v1210 = vsel %vm1181, %v902, 0.0
      %v1211 = vsel %vm1181, %v909, 0.0
      %v1212 = vsel %vm1181, %v916, 0.0
      %v1213 = vsel %vm1181, %v923, 0.0
      %v1214 = vsel %vm1181, %v930, 0.0
      %v1215 = vsel %vm1181, %v937, 0.0
      %v1216 = vsel %vm1182, %v1052, 0.0
      %v1217 = vsel %vm1182, %v1059, 0.0
      %v1218 = vsel %vm1182, %v1066, 0.0
      %v1219 = vsel %vm1182, %v1073, 0.0
      %v1220 = vsel %vm1182, %v1080, 0.0
      %v1221 = vsel %vm1182, %v1087, 0.0
      %v1222 = vsel %vm1182, %v1094, 0.0
      %v1223 = vsel %vm1182, %v1101, 0.0
      %v1224 = vsel %vm1183, %v1108, 0.0
      %v1225 = vsel %vm1183, %v1115, 0.0
      %v1226 = vsel %vm1183, %v1122, 0.0
      %v1227 = vsel %vm1183, %v1129, 0.0
      %v1228 = vsel %vm1183, %v1136, 0.0
      %v1229 = vsel %vm1183, %v1143, 0.0
      %v1230 = vsel %vm1183, %v1150, 0.0
      %v1231 = vsel %vm1183, %v1157, 0.0
      %v1274 = vrot.slane %v1184, 7
      %v1275 = vrot.slane %v1185, 6
      %vm1276 = vcmask 1042434
      %v1277 = vsel %vm1276, %v1275, %v1274
      %v1278 = vrot.slane %v1186, 5
      %vm1279 = vcmask 1043459
      %v1280 = vsel %vm1279, %v1278, %v1277
      %v1281 = vrot.slane %v1187, 4
      %vm1282 = vcmask 1044484
      %v1283 = vsel %vm1282, %v1281, %v1280
      %v1284 = vrot.slane %v1188, 3
      %vm1285 = vcmask 1045509
      %v1286 = vsel %vm1285, %v1284, %v1283
      %v1287 = vrot.slane %v1189, 2
      %vm1288 = vcmask 1046534
      %v1289 = vsel %vm1288, %v1287, %v1286
      %v1290 = vrot.slane %v1190, 1
      %vm1291 = vcmask 1047559
      %v1292 = vsel %vm1291, %v1290, %v1289
      %v1293 = vrot.slane %v1192, 7
      %v1294 = vrot.slane %v1193, 6
      %v1295 = vsel %vm1276, %v1294, %v1293
      %v1296 = vrot.slane %v1194, 5
      %v1297 = vsel %vm1279, %v1296, %v1295
      %v1298 = vrot.slane %v1195, 4
      %v1299 = vsel %vm1282, %v1298, %v1297
      %v1300 = vrot.slane %v1196, 3
      %v1301 = vsel %vm1285, %v1300, %v1299
      %v1302 = vrot.slane %v1197, 2
      %v1303 = vsel %vm1288, %v1302, %v1301
      %v1304 = vrot.slane %v1198, 1
      %v1305 = vsel %vm1291, %v1304, %v1303
      %v1306 = vrot.slane %v1200, 7
      %v1307 = vrot.slane %v1201, 6
      %v1308 = vsel %vm1276, %v1307, %v1306
      %v1309 = vrot.slane %v1202, 5
      %v1310 = vsel %vm1279, %v1309, %v1308
      %v1311 = vrot.slane %v1203, 4
      %v1312 = vsel %vm1282, %v1311, %v1310
      %v1313 = vrot.slane %v1204, 3
      %v1314 = vsel %vm1285, %v1313, %v1312
      %v1315 = vrot.slane %v1205, 2
      %v1316 = vsel %vm1288, %v1315, %v1314
      %v1317 = vrot.slane %v1206, 1
      %v1318 = vsel %vm1291, %v1317, %v1316
      %v1319 = vrot.slane %v1208, 7
      %v1320 = vrot.slane %v1209, 6
      %v1321 = vsel %vm1276, %v1320, %v1319
      %v1322 = vrot.slane %v1210, 5
      %v1323 = vsel %vm1279, %v1322, %v1321
      %v1324 = vrot.slane %v1211, 4
      %v1325 = vsel %vm1282, %v1324, %v1323
      %v1326 = vrot.slane %v1212, 3
      %v1327 = vsel %vm1285, %v1326, %v1325
      %v1328 = vrot.slane %v1213, 2
      %v1329 = vsel %vm1288, %v1328, %v1327
      %v1330 = vrot.slane %v1214, 1
      %v1331 = vsel %vm1291, %v1330, %v1329
      %v1332 = vrot.slane %v1216, 7
      %v1333 = vrot.slane %v1217, 6
      %v1334 = vsel %vm1276, %v1333, %v1332
      %v1335 = vrot.slane %v1218, 5
      %v1336 = vsel %vm1279, %v1335, %v1334
      %v1337 = vrot.slane %v1219, 4
      %v1338 = vsel %vm1282, %v1337, %v1336
      %v1339 = vrot.slane %v1220, 3
      %v1340 = vsel %vm1285, %v1339, %v1338
      %v1341 = vrot.slane %v1221, 2
      %v1342 = vsel %vm1288, %v1341, %v1340
      %v1343 = vrot.slane %v1222, 1
      %v1344 = vsel %vm1291, %v1343, %v1342
      %v1345 = vrot.slane %v1224, 7
      %v1346 = vrot.slane %v1225, 6
      %v1347 = vsel %vm1276, %v1346, %v1345
      %v1348 = vrot.slane %v1226, 5
      %v1349 = vsel %vm1279, %v1348, %v1347
      %v1350 = vrot.slane %v1227, 4
      %v1351 = vsel %vm1282, %v1350, %v1349
      %v1352 = vrot.slane %v1228, 3
      %v1353 = vsel %vm1285, %v1352, %v1351
      %v1354 = vrot.slane %v1229, 2
      %v1355 = vsel %vm1288, %v1354, %v1353
      %v1356 = vrot.slane %v1230, 1
      %v1357 = vsel %vm1291, %v1356, %v1355
      %vm1364 = vcmask 1040384
      %v1365 = vsel %vm1364, 0.0, %v1292
      %v1366 = vsel %vm1364, 0.0, %v1305
      %v1367 = vsel %vm1364, 0.0, %v1318
      %v1368 = vsel %vm1364, 0.0, %v1331
      %v1369 = vsel %vm1364, 0.0, %v1344
      %v1370 = vsel %vm1364, 0.0, %v1357
      %v1377 = vrot.slane %v1186, 7
      %vm1378 = vcmask 1041409
      %v1379 = vsel %vm1378, %v1377, %v1185
      %v1380 = vrot.slane %v1187, 6
      %v1381 = vsel %vm1276, %v1380, %v1379
      %v1382 = vrot.slane %v1188, 5
      %v1383 = vsel %vm1279, %v1382, %v1381
      %v1384 = vrot.slane %v1189, 4
      %v1385 = vsel %vm1282, %v1384, %v1383
      %v1386 = vrot.slane %v1190, 3
      %v1387 = vsel %vm1285, %v1386, %v1385
      %v1388 = vrot.slane %v1191, 2
      %v1389 = vsel %vm1288, %v1388, %v1387
      %v1390 = vrot.slane %v1194, 7
      %v1391 = vsel %vm1378, %v1390, %v1193
      %v1392 = vrot.slane %v1195, 6
      %v1393 = vsel %vm1276, %v1392, %v1391
      %v1394 = vrot.slane %v1196, 5
      %v1395 = vsel %vm1279, %v1394, %v1393
      %v1396 = vrot.slane %v1197, 4
      %v1397 = vsel %vm1282, %v1396, %v1395
      %v1398 = vrot.slane %v1198, 3
      %v1399 = vsel %vm1285, %v1398, %v1397
      %v1400 = vrot.slane %v1199, 2
      %v1401 = vsel %vm1288, %v1400, %v1399
      %v1402 = vrot.slane %v1202, 7
      %v1403 = vsel %vm1378, %v1402, %v1201
      %v1404 = vrot.slane %v1203, 6
      %v1405 = vsel %vm1276, %v1404, %v1403
      %v1406 = vrot.slane %v1204, 5
      %v1407 = vsel %vm1279, %v1406, %v1405
      %v1408 = vrot.slane %v1205, 4
      %v1409 = vsel %vm1282, %v1408, %v1407
      %v1410 = vrot.slane %v1206, 3
      %v1411 = vsel %vm1285, %v1410, %v1409
      %v1412 = vrot.slane %v1207, 2
      %v1413 = vsel %vm1288, %v1412, %v1411
      %v1414 = vrot.slane %v1210, 7
      %v1415 = vsel %vm1378, %v1414, %v1209
      %v1416 = vrot.slane %v1211, 6
      %v1417 = vsel %vm1276, %v1416, %v1415
      %v1418 = vrot.slane %v1212, 5
      %v1419 = vsel %vm1279, %v1418, %v1417
      %v1420 = vrot.slane %v1213, 4
      %v1421 = vsel %vm1282, %v1420, %v1419
      %v1422 = vrot.slane %v1214, 3
      %v1423 = vsel %vm1285, %v1422, %v1421
      %v1424 = vrot.slane %v1215, 2
      %v1425 = vsel %vm1288, %v1424, %v1423
      %v1426 = vrot.slane %v1218, 7
      %v1427 = vsel %vm1378, %v1426, %v1217
      %v1428 = vrot.slane %v1219, 6
      %v1429 = vsel %vm1276, %v1428, %v1427
      %v1430 = vrot.slane %v1220, 5
      %v1431 = vsel %vm1279, %v1430, %v1429
      %v1432 = vrot.slane %v1221, 4
      %v1433 = vsel %vm1282, %v1432, %v1431
      %v1434 = vrot.slane %v1222, 3
      %v1435 = vsel %vm1285, %v1434, %v1433
      %v1436 = vrot.slane %v1223, 2
      %v1437 = vsel %vm1288, %v1436, %v1435
      %v1438 = vrot.slane %v1226, 7
      %v1439 = vsel %vm1378, %v1438, %v1225
      %v1440 = vrot.slane %v1227, 6
      %v1441 = vsel %vm1276, %v1440, %v1439
      %v1442 = vrot.slane %v1228, 5
      %v1443 = vsel %vm1279, %v1442, %v1441
      %v1444 = vrot.slane %v1229, 4
      %v1445 = vsel %vm1282, %v1444, %v1443
      %v1446 = vrot.slane %v1230, 3
      %v1447 = vsel %vm1285, %v1446, %v1445
      %v1448 = vrot.slane %v1231, 2
      %v1449 = vsel %vm1288, %v1448, %v1447
      %vm1456 = vcmask 1046528
      %v1457 = vsel %vm1456, %v1389, 0.0
      %v1458 = vsel %vm1456, %v1401, 0.0
      %v1459 = vsel %vm1456, %v1413, 0.0
      %v1460 = vsel %vm1456, %v1425, 0.0
      %v1461 = vsel %vm1456, %v1437, 0.0
      %v1462 = vsel %vm1456, %v1449, 0.0
      %v1463 = vrot.slane %v1185, 7
      %v1464 = vsel %vm1378, %v1463, %v1184
      %v1465 = vrot.slane %v1186, 6
      %v1466 = vsel %vm1276, %v1465, %v1464
      %v1467 = vrot.slane %v1187, 5
      %v1468 = vsel %vm1279, %v1467, %v1466
      %v1469 = vrot.slane %v1188, 4
      %v1470 = vsel %vm1282, %v1469, %v1468
      %v1471 = vrot.slane %v1189, 3
      %v1472 = vsel %vm1285, %v1471, %v1470
      %v1473 = vrot.slane %v1190, 2
      %v1474 = vsel %vm1288, %v1473, %v1472
      %v1475 = vrot.slane %v1191, 1
      %v1476 = vsel %vm1291, %v1475, %v1474
      %v1477 = vrot.slane %v1193, 7
      %v1478 = vsel %vm1378, %v1477, %v1192
      %v1479 = vrot.slane %v1194, 6
      %v1480 = vsel %vm1276, %v1479, %v1478
      %v1481 = vrot.slane %v1195, 5
      %v1482 = vsel %vm1279, %v1481, %v1480
      %v1483 = vrot.slane %v1196, 4
      %v1484 = vsel %vm1282, %v1483, %v1482
      %v1485 = vrot.slane %v1197, 3
      %v1486 = vsel %vm1285, %v1485, %v1484
      %v1487 = vrot.slane %v1198, 2
      %v1488 = vsel %vm1288, %v1487, %v1486
      %v1489 = vrot.slane %v1199, 1
      %v1490 = vsel %vm1291, %v1489, %v1488
      %v1491 = vrot.slane %v1201, 7
      %v1492 = vsel %vm1378, %v1491, %v1200
      %v1493 = vrot.slane %v1202, 6
      %v1494 = vsel %vm1276, %v1493, %v1492
      %v1495 = vrot.slane %v1203, 5
      %v1496 = vsel %vm1279, %v1495, %v1494
      %v1497 = vrot.slane %v1204, 4
      %v1498 = vsel %vm1282, %v1497, %v1496
      %v1499 = vrot.slane %v1205, 3
      %v1500 = vsel %vm1285, %v1499, %v1498
      %v1501 = vrot.slane %v1206, 2
      %v1502 = vsel %vm1288, %v1501, %v1500
      %v1503 = vrot.slane %v1207, 1
      %v1504 = vsel %vm1291, %v1503, %v1502
      %v1505 = vrot.slane %v1209, 7
      %v1506 = vsel %vm1378, %v1505, %v1208
      %v1507 = vrot.slane %v1210, 6
      %v1508 = vsel %vm1276, %v1507, %v1506
      %v1509 = vrot.slane %v1211, 5
      %v1510 = vsel %vm1279, %v1509, %v1508
      %v1511 = vrot.slane %v1212, 4
      %v1512 = vsel %vm1282, %v1511, %v1510
      %v1513 = vrot.slane %v1213, 3
      %v1514 = vsel %vm1285, %v1513, %v1512
      %v1515 = vrot.slane %v1214, 2
      %v1516 = vsel %vm1288, %v1515, %v1514
      %v1517 = vrot.slane %v1215, 1
      %v1518 = vsel %vm1291, %v1517, %v1516
      %v1519 = vrot.slane %v1217, 7
      %v1520 = vsel %vm1378, %v1519, %v1216
      %v1521 = vrot.slane %v1218, 6
      %v1522 = vsel %vm1276, %v1521, %v1520
      %v1523 = vrot.slane %v1219, 5
      %v1524 = vsel %vm1279, %v1523, %v1522
      %v1525 = vrot.slane %v1220, 4
      %v1526 = vsel %vm1282, %v1525, %v1524
      %v1527 = vrot.slane %v1221, 3
      %v1528 = vsel %vm1285, %v1527, %v1526
      %v1529 = vrot.slane %v1222, 2
      %v1530 = vsel %vm1288, %v1529, %v1528
      %v1531 = vrot.slane %v1223, 1
      %v1532 = vsel %vm1291, %v1531, %v1530
      %v1533 = vrot.slane %v1225, 7
      %v1534 = vsel %vm1378, %v1533, %v1224
      %v1535 = vrot.slane %v1226, 6
      %v1536 = vsel %vm1276, %v1535, %v1534
      %v1537 = vrot.slane %v1227, 5
      %v1538 = vsel %vm1279, %v1537, %v1536
      %v1539 = vrot.slane %v1228, 4
      %v1540 = vsel %vm1282, %v1539, %v1538
      %v1541 = vrot.slane %v1229, 3
      %v1542 = vsel %vm1285, %v1541, %v1540
      %v1543 = vrot.slane %v1230, 2
      %v1544 = vsel %vm1288, %v1543, %v1542
      %v1545 = vrot.slane %v1231, 1
      %v1546 = vsel %vm1291, %v1545, %v1544
      %1547 = vrot.lane.b32.xlu0 %v1476, 4
      %v1548 = vpop.permute.xlu0 %1547
      %1549 = vrot.lane.b32.xlu0 %v1490, 4
      %v1550 = vpop.permute.xlu0 %1549
      %1551 = vrot.lane.b32.xlu0 %v1504, 4
      %v1552 = vpop.permute.xlu0 %1551
      %1553 = vrot.lane.b32.xlu0 %v1518, 4
      %v1554 = vpop.permute.xlu0 %1553
      %1555 = vrot.lane.b32.xlu0 %v1532, 4
      %v1556 = vpop.permute.xlu0 %1555
      %1557 = vrot.lane.b32.xlu0 %v1546, 4
      %v1558 = vpop.permute.xlu0 %1557
      %1571 = vrot.lane.b32.xlu0 %v1457, 8
      %v1572 = vpop.permute.xlu0 %1571
      %1573 = vrot.lane.b32.xlu0 %v1458, 8
      %v1574 = vpop.permute.xlu0 %1573
      %1575 = vrot.lane.b32.xlu0 %v1459, 8
      %v1576 = vpop.permute.xlu0 %1575
      %1577 = vrot.lane.b32.xlu0 %v1460, 8
      %v1578 = vpop.permute.xlu0 %1577
      %1579 = vrot.lane.b32.xlu0 %v1461, 8
      %v1580 = vpop.permute.xlu0 %1579
      %1581 = vrot.lane.b32.xlu0 %v1462, 8
      %v1582 = vpop.permute.xlu0 %1581
      %v1589 = vsel %vm504, %v1365, %v1548
      %v1590 = vsel %vm504, %v1366, %v1550
      %v1591 = vsel %vm504, %v1367, %v1552
      %v1592 = vsel %vm504, %v1368, %v1554
      %v1593 = vsel %vm504, %v1369, %v1556
      %v1594 = vsel %vm504, %v1370, %v1558
      %vm1595 = vcmask 64512
      %v1596 = vsel %vm1595, %v1589, %v1572
      %v1597 = vsel %vm1595, %v1590, %v1574
      %v1598 = vsel %vm1595, %v1591, %v1576
      %v1599 = vsel %vm1595, %v1592, %v1578
      %v1600 = vsel %vm1595, %v1593, %v1580
      %v1601 = vsel %vm1595, %v1594, %v1582
      %v1602 = vpack.c.bf16 %v1597, %v1596
      %v1603 = vpack.c.bf16 %v1599, %v1598
      %v1604 = vpack.c.bf16 %v1601, %v1600
      %v1605 = vld [vmem:[%s3] sm:$0xf]
      %v1606 = vld [vmem:[%s3 + $0x4] sm:$0x3]
      %s1607 = scalar_lea.vmem %s3, 8
      %v1608 = vld [vmem:[%s1607] sm:$0xf]
      %v1609 = vld [vmem:[%s1607 + $0x4] sm:$0x3]
      %vm1613 = vcmask 1043456
      %v1614 = vrot.slane %v1602, 4
      %v1615 = vrot.slane %v1603, 4
      %v1616 = vsel %vm1613, %v1614, %v1615
      %v1617 = vrot.slane %v1604, 4
      %v1618 = vsel %vm1613, %v1615, %v1617
      %v1621 = vunpack.c.l.b16 %v1608
      %v1622 = vunpack.c.l.b16 %v1609
      %v1623 = vpack.c.b16 %v1622, %v1621
      %vm1624 = vcmask 97280
      %v1626 = vsel %vm1624, %v1616, 0
      %v1629 = vsel %vm1624, %v1618, 0
      %vm1631 = vcmask 1045504
      %v1633 = vsel %vm1631, %v1623, 0
      %1635 = vmatprep.subr.bf16.mxu0 0
      %1636 = vmatpush1.bf16.msra.mxu0 0
      %1637 = vmatprep.subr.bf16.mxu0 0
      %1638 = vmatpush1.bf16.msra.mxu0 0
      %1639 = vmatprep.subr.bf16.mxu0 0
      %1640 = vmatpush1.bf16.msra.mxu0 0
      %1641 = vmatprep.subr.bf16.mxu0 0
      %1642 = vmatpush1.bf16.msra.mxu0 0
      %1643 = vmatprep.subr.bf16.mxu0 0
      %1644 = vmatpush1.bf16.msra.mxu0 0
      %1645 = vmatprep.subr.bf16.mxu0 0
      %1646 = vmatpush1.bf16.msra.mxu0 0
      %1647 = vmatprep.subr.bf16.mxu0 0
      %1648 = vmatpush1.bf16.msra.mxu0 0
      %1649 = vmatprep.subr.bf16.mxu0 0
      %1650 = vmatpush1.bf16.msra.mxu0 %v1633
      %1651 = vmatprep.subr.bf16.mxu0 0
      %1652 = vmatpush2.bf16.msra.mxu0 0
      %1653 = vmatprep.subr.bf16.mxu0 0
      %1654 = vmatpush2.bf16.msra.mxu0 0
      %1655 = vmatprep.subr.bf16.mxu0 0
      %1656 = vmatpush2.bf16.msra.mxu0 0
      %1657 = vmatprep.subr.bf16.mxu0 0
      %1658 = vmatpush2.bf16.msra.mxu0 0
      %1659 = vmatprep.subr.bf16.mxu0 0
      %1660 = vmatpush2.bf16.msra.mxu0 0
      %1661 = vmatprep.subr.bf16.mxu0 0
      %1662 = vmatpush2.bf16.msra.mxu0 0
      %1663 = vmatprep.subr.bf16.mxu0 0
      %1664 = vmatpush2.bf16.msra.mxu0 0
      %1665 = vmatprep.subr.bf16.mxu0 0
      %1666 = vmatpush2.bf16.msra.mxu0 0
      %1667 = vmatprep.mubr.bf16.mxu0 0
      %1668 = vmatmul.mubr.bf16.gmra.mxu0 %v1626
      %v1669 = vpop.f32.mrf.mxu0
      %v1670 = vadd.f32 0.0, %v1669
      %v1671 = vpop.f32.mrf.mxu0
      %v1672 = vpop.f32.mrf.mxu0
      %v1673 = vadd.f32 0.0, %v1672
      %v1674 = vpop.f32.mrf.mxu0
      %1675 = vmatprep.mubr.bf16.mxu0 0
      %1676 = vmatmul.mubr.bf16.gmra.mxu0 %v1629
      %v1677 = vpop.f32.mrf.mxu0
      %v1678 = vadd.f32 0.0, %v1677
      %v1679 = vpop.f32.mrf.mxu0
      %v1680 = vpop.f32.mrf.mxu0
      %v1681 = vadd.f32 0.0, %v1680
      %v1682 = vpop.f32.mrf.mxu0
      %1683 = vdwg.mxu0
      %v1686 = vunpack.c.l.b16 %v1605
      %v1687 = vunpack.c.l.b16 %v1606
      %v1688 = vpack.c.b16 %v1687, %v1686
      %v1690 = vsel %vm1624, %v1602, 0
      %v1693 = vsel %vm1624, %v1603, 0
      %v1696 = vsel %vm1631, %v1688, 0
      %1698 = vmatprep.subr.bf16.mxu0 0
      %1699 = vmatpush1.bf16.msra.mxu0 0
      %1700 = vmatprep.subr.bf16.mxu0 0
      %1701 = vmatpush1.bf16.msra.mxu0 0
      %1702 = vmatprep.subr.bf16.mxu0 0
      %1703 = vmatpush1.bf16.msra.mxu0 0
      %1704 = vmatprep.subr.bf16.mxu0 0
      %1705 = vmatpush1.bf16.msra.mxu0 0
      %1706 = vmatprep.subr.bf16.mxu0 0
      %1707 = vmatpush1.bf16.msra.mxu0 0
      %1708 = vmatprep.subr.bf16.mxu0 0
      %1709 = vmatpush1.bf16.msra.mxu0 0
      %1710 = vmatprep.subr.bf16.mxu0 0
      %1711 = vmatpush1.bf16.msra.mxu0 0
      %1712 = vmatprep.subr.bf16.mxu0 0
      %1713 = vmatpush1.bf16.msra.mxu0 %v1696
      %1714 = vmatprep.subr.bf16.mxu0 0
      %1715 = vmatpush2.bf16.msra.mxu0 0
      %1716 = vmatprep.subr.bf16.mxu0 0
      %1717 = vmatpush2.bf16.msra.mxu0 0
      %1718 = vmatprep.subr.bf16.mxu0 0
      %1719 = vmatpush2.bf16.msra.mxu0 0
      %1720 = vmatprep.subr.bf16.mxu0 0
      %1721 = vmatpush2.bf16.msra.mxu0 0
      %1722 = vmatprep.subr.bf16.mxu0 0
      %1723 = vmatpush2.bf16.msra.mxu0 0
      %1724 = vmatprep.subr.bf16.mxu0 0
      %1725 = vmatpush2.bf16.msra.mxu0 0
      %1726 = vmatprep.subr.bf16.mxu0 0
      %1727 = vmatpush2.bf16.msra.mxu0 0
      %1728 = vmatprep.subr.bf16.mxu0 0
      %1729 = vmatpush2.bf16.msra.mxu0 0
      %1730 = vmatprep.mubr.bf16.mxu0 0
      %1731 = vmatmul.mubr.bf16.gmra.mxu0 %v1690
      %v1732 = vpop.f32.mrf.mxu0
      %v1733 = vadd.f32 %v1670, %v1732
      %v1734 = vpop.f32.mrf.mxu0
      %v1735 = vpop.f32.mrf.mxu0
      %v1736 = vadd.f32 %v1673, %v1735
      %v1737 = vpop.f32.mrf.mxu0
      %1738 = vmatprep.mubr.bf16.mxu0 0
      %1739 = vmatmul.mubr.bf16.gmra.mxu0 %v1693
      %v1740 = vpop.f32.mrf.mxu0
      %v1741 = vadd.f32 %v1678, %v1740
      %v1742 = vpop.f32.mrf.mxu0
      %v1743 = vpop.f32.mrf.mxu0
      %v1744 = vadd.f32 %v1681, %v1743
      %v1745 = vpop.f32.mrf.mxu0
      %1746 = vdwg.mxu0
      %s1747 = scalar_lea.vmem %s3, 16
      %v1748 = vld [vmem:[%s1747] sm:$0xf]
      %v1749 = vld [vmem:[%s1747 + $0x4] sm:$0x3]
      %v1752 = vunpack.c.l.b16 %v1748
      %v1753 = vunpack.c.l.b16 %v1749
      %v1754 = vpack.c.b16 %v1753, %v1752
      %v1756 = vsel %vm1624, %v1604, 0
      %v1759 = vsel %vm1631, %v1754, 0
      %1761 = vmatprep.subr.bf16.mxu0 0
      %1762 = vmatpush1.bf16.msra.mxu0 0
      %1763 = vmatprep.subr.bf16.mxu0 0
      %1764 = vmatpush1.bf16.msra.mxu0 0
      %1765 = vmatprep.subr.bf16.mxu0 0
      %1766 = vmatpush1.bf16.msra.mxu0 0
      %1767 = vmatprep.subr.bf16.mxu0 0
      %1768 = vmatpush1.bf16.msra.mxu0 0
      %1769 = vmatprep.subr.bf16.mxu0 0
      %1770 = vmatpush1.bf16.msra.mxu0 0
      %1771 = vmatprep.subr.bf16.mxu0 0
      %1772 = vmatpush1.bf16.msra.mxu0 0
      %1773 = vmatprep.subr.bf16.mxu0 0
      %1774 = vmatpush1.bf16.msra.mxu0 0
      %1775 = vmatprep.subr.bf16.mxu0 0
      %1776 = vmatpush1.bf16.msra.mxu0 %v1759
      %1777 = vmatprep.subr.bf16.mxu0 0
      %1778 = vmatpush2.bf16.msra.mxu0 0
      %1779 = vmatprep.subr.bf16.mxu0 0
      %1780 = vmatpush2.bf16.msra.mxu0 0
      %1781 = vmatprep.subr.bf16.mxu0 0
      %1782 = vmatpush2.bf16.msra.mxu0 0
      %1783 = vmatprep.subr.bf16.mxu0 0
      %1784 = vmatpush2.bf16.msra.mxu0 0
      %1785 = vmatprep.subr.bf16.mxu0 0
      %1786 = vmatpush2.bf16.msra.mxu0 0
      %1787 = vmatprep.subr.bf16.mxu0 0
      %1788 = vmatpush2.bf16.msra.mxu0 0
      %1789 = vmatprep.subr.bf16.mxu0 0
      %1790 = vmatpush2.bf16.msra.mxu0 0
      %1791 = vmatprep.subr.bf16.mxu0 0
      %1792 = vmatpush2.bf16.msra.mxu0 0
      %1793 = vmatprep.mubr.bf16.mxu0 0
      %1794 = vmatmul.mubr.bf16.gmra.mxu0 %v1693
      %v1795 = vpop.f32.mrf.mxu0
      %v1796 = vadd.f32 0.0, %v1795
      %v1797 = vpop.f32.mrf.mxu0
      %v1798 = vpop.f32.mrf.mxu0
      %v1799 = vadd.f32 0.0, %v1798
      %v1800 = vpop.f32.mrf.mxu0
      %1801 = vmatprep.mubr.bf16.mxu0 0
      %1802 = vmatmul.mubr.bf16.gmra.mxu0 %v1756
      %v1803 = vpop.f32.mrf.mxu0
      %v1804 = vadd.f32 0.0, %v1803
      %v1805 = vpop.f32.mrf.mxu0
      %v1806 = vpop.f32.mrf.mxu0
      %v1807 = vadd.f32 0.0, %v1806
      %v1808 = vpop.f32.mrf.mxu0
      %1809 = vdwg.mxu0
      %v1810 = vadd.f32 %v1733, %v1796
      %v1811 = vadd.f32 %v1736, %v1799
      %v1812 = vadd.f32 %v1741, %v1804
      %v1813 = vadd.f32 %v1744, %v1807
      %v1814 = vld [vmem:[%s4] sm:$0x1]
      %v1816 = vlaneseq
      %v1817 = vshrl.u32 %v1816, 7
      %v1818 = vsub.s32 0, %v1817
      %v1819 = vrot.slane %v1814, %v1818
      %v1821 = vmul.f32 %v1810, %v1819
      %v1822 = vmul.f32 %v1811, %v1819
      %v1823 = vmul.f32 %v1812, %v1819
      %v1824 = vmul.f32 %v1813, %v1819
      %v1825 = vld [vmem:[%s5] sm:$0x1]
      %v1827 = vlaneseq
      %v1828 = vshrl.u32 %v1827, 7
      %v1829 = vsub.s32 0, %v1828
      %v1830 = vrot.slane %v1825, %v1829
      %v1832 = vadd.f32 %v1821, %v1830
      %v1833 = vadd.f32 %v1822, %v1830
      %v1834 = vadd.f32 %v1823, %v1830
      %v1835 = vadd.f32 %v1824, %v1830
      %v1836 = vmax.f32 %v1832, 0.0
      %v1837 = vmax.f32 %v1833, 0.0
      %v1838 = vmax.f32 %v1834, 0.0
      %v1839 = vmax.f32 %v1835, 0.0
      %s1840 = ssub.s32 %s1158, 1
      %v1841 = vstv %s1840
      %v1842 = vadd.s32 %v1841, 1
      %v1843 = vadd.s32 %v1841, 2
      %v1844 = vadd.s32 %v1841, 3
      %vm1845 = vcmp.ge.s32.totalorder %v1841, 0
      %vm1846 = vcmp.ge.s32.totalorder %v1842, 0
      %vm1847 = vcmp.ge.s32.totalorder %v1843, 0
      %vm1848 = vcmp.ge.s32.totalorder %v1844, 0
      %vm1849 = vcmp.lt.s32.totalorder %v1841, 8
      %vm1850 = vcmp.lt.s32.totalorder %v1842, 8
      %vm1851 = vcmp.lt.s32.totalorder %v1843, 8
      %vm1852 = vcmp.lt.s32.totalorder %v1844, 8
      %vm1853 = vmand %vm1845, %vm1849
      %vm1854 = vmand %vm1846, %vm1850
      %vm1855 = vmand %vm1847, %vm1851
      %vm1856 = vmand %vm1848, %vm1852
      %v1857 = vsel %vm1853, %v1836, 0.0
      %v1858 = vsel %vm1854, %v1837, 0.0
      %v1859 = vsel %vm1855, %v1838, 0.0
      %v1860 = vsel %vm1856, %v1839, 0.0
      %v1865 = vrot.slane %v1857, 7
      %v1866 = vrot.slane %v1858, 7
      %v1867 = vrot.slane %v1859, 7
      %v1868 = vrot.slane %v1860, 7
      %v1873 = vsel %vm1364, 0.0, %v1865
      %v1874 = vsel %vm1364, 0.0, %v1866
      %v1875 = vsel %vm1364, 0.0, %v1867
      %v1876 = vsel %vm1364, 0.0, %v1868
      %v1877 = vrot.slane %v1857, 1
      %v1878 = vrot.slane %v1858, 1
      %v1879 = vrot.slane %v1859, 1
      %v1880 = vrot.slane %v1860, 1
      %v1885 = vsel %vm1456, %v1877, 0.0
      %v1886 = vsel %vm1456, %v1878, 0.0
      %v1887 = vsel %vm1456, %v1879, 0.0
      %v1888 = vsel %vm1456, %v1880, 0.0
      %1889 = vrot.lane.b32.xlu0 %v1857, 8
      %v1890 = vpop.permute.xlu0 %1889
      %1891 = vrot.lane.b32.xlu0 %v1858, 8
      %v1892 = vpop.permute.xlu0 %1891
      %1893 = vrot.lane.b32.xlu0 %v1859, 8
      %v1894 = vpop.permute.xlu0 %1893
      %1895 = vrot.lane.b32.xlu0 %v1860, 8
      %v1896 = vpop.permute.xlu0 %1895
      %1905 = vrot.lane.b32.xlu0 %v1885, 16
      %v1906 = vpop.permute.xlu0 %1905
      %1907 = vrot.lane.b32.xlu0 %v1886, 16
      %v1908 = vpop.permute.xlu0 %1907
      %1909 = vrot.lane.b32.xlu0 %v1887, 16
      %v1910 = vpop.permute.xlu0 %1909
      %1911 = vrot.lane.b32.xlu0 %v1888, 16
      %v1912 = vpop.permute.xlu0 %1911
      %v1917 = vsel %vm1595, %v1873, %v1890
      %v1918 = vsel %vm1595, %v1874, %v1892
      %v1919 = vsel %vm1595, %v1875, %v1894
      %v1920 = vsel %vm1595, %v1876, %v1896
      %vm1921 = vcmask 130048
      %v1922 = vsel %vm1921, %v1917, %v1906
      %v1923 = vsel %vm1921, %v1918, %v1908
      %v1924 = vsel %vm1921, %v1919, %v1910
      %v1925 = vsel %vm1921, %v1920, %v1912
      %v1926 = vpack.c.bf16 %v1923, %v1922
      %v1927 = vpack.c.bf16 %v1925, %v1924
      %v1928 = vld [vmem:[%s6] sm:$0xf]
      %v1929 = vld [vmem:[%s6 + $0x4] sm:$0xf]
      %v1930 = vld [vmem:[%s6 + $0x8] sm:$0xf]
      %s1931 = scalar_lea.vmem %s6, 12
      %v1932 = vld [vmem:[%s1931] sm:$0xf]
      %v1933 = vld [vmem:[%s1931 + $0x4] sm:$0xf]
      %v1934 = vld [vmem:[%s1931 + $0x8] sm:$0xf]
      %v1937 = vrot.slane %v1926, 4
      %v1938 = vrot.slane %v1927, 4
      %v1939 = vsel %vm1613, %v1937, %v1938
      %v1943 = vunpack.c.l.b16 %v1932
      %v1944 = vunpack.c.l.b16 %v1933
      %v1945 = vunpack.c.l.b16 %v1934
      %v1946 = vpack.c.b16 %v1944, %v1943
      %v1947 = vpack.c.b16 %v1945, %v1945
      %vm1949 = vcmask 195584
      %v1951 = vsel %vm1949, %v1939, 0
      %vm1953 = vcmask 1043456
      %v1955 = vsel %vm1953, %v1947, 0
      %1957 = vmatprep.subr.bf16.mxu0 0
      %1958 = vmatpush1.bf16.msra.mxu0 0
      %1959 = vmatprep.subr.bf16.mxu0 0
      %1960 = vmatpush1.bf16.msra.mxu0 0
      %1961 = vmatprep.subr.bf16.mxu0 0
      %1962 = vmatpush1.bf16.msra.mxu0 0
      %1963 = vmatprep.subr.bf16.mxu0 0
      %1964 = vmatpush1.bf16.msra.mxu0 0
      %1965 = vmatprep.subr.bf16.mxu0 0
      %1966 = vmatpush1.bf16.msra.mxu0 0
      %1967 = vmatprep.subr.bf16.mxu0 0
      %1968 = vmatpush1.bf16.msra.mxu0 0
      %1969 = vmatprep.subr.bf16.mxu0 0
      %1970 = vmatpush1.bf16.msra.mxu0 %v1955
      %1971 = vmatprep.subr.bf16.mxu0 0
      %1972 = vmatpush1.bf16.msra.mxu0 %v1946
      %1973 = vmatprep.subr.bf16.mxu0 0
      %1974 = vmatpush2.bf16.msra.mxu0 0
      %1975 = vmatprep.subr.bf16.mxu0 0
      %1976 = vmatpush2.bf16.msra.mxu0 0
      %1977 = vmatprep.subr.bf16.mxu0 0
      %1978 = vmatpush2.bf16.msra.mxu0 0
      %1979 = vmatprep.subr.bf16.mxu0 0
      %1980 = vmatpush2.bf16.msra.mxu0 0
      %1981 = vmatprep.subr.bf16.mxu0 0
      %1982 = vmatpush2.bf16.msra.mxu0 0
      %1983 = vmatprep.subr.bf16.mxu0 0
      %1984 = vmatpush2.bf16.msra.mxu0 0
      %1985 = vmatprep.subr.bf16.mxu0 0
      %1986 = vmatpush2.bf16.msra.mxu0 0
      %1987 = vmatprep.subr.bf16.mxu0 0
      %1988 = vmatpush2.bf16.msra.mxu0 0
      %1989 = vmatprep.mubr.bf16.mxu0 0
      %1990 = vmatmul.mubr.bf16.gmra.mxu0 %v1951
      %v1991 = vpop.f32.mrf.mxu0
      %v1992 = vadd.f32 0.0, %v1991
      %v1993 = vpop.f32.mrf.mxu0
      %v1994 = vpop.f32.mrf.mxu0
      %v1995 = vadd.f32 0.0, %v1994
      %v1996 = vpop.f32.mrf.mxu0
      %1997 = vdwg.mxu0
      %v2001 = vunpack.c.l.b16 %v1928
      %v2002 = vunpack.c.l.b16 %v1929
      %v2003 = vunpack.c.l.b16 %v1930
      %v2004 = vpack.c.b16 %v2002, %v2001
      %v2005 = vpack.c.b16 %v2003, %v2003
      %v2008 = vsel %vm1949, %v1926, 0
      %v2011 = vsel %vm1953, %v2005, 0
      %2013 = vmatprep.subr.bf16.mxu0 0
      %2014 = vmatpush1.bf16.msra.mxu0 0
      %2015 = vmatprep.subr.bf16.mxu0 0
      %2016 = vmatpush1.bf16.msra.mxu0 0
      %2017 = vmatprep.subr.bf16.mxu0 0
      %2018 = vmatpush1.bf16.msra.mxu0 0
      %2019 = vmatprep.subr.bf16.mxu0 0
      %2020 = vmatpush1.bf16.msra.mxu0 0
      %2021 = vmatprep.subr.bf16.mxu0 0
      %2022 = vmatpush1.bf16.msra.mxu0 0
      %2023 = vmatprep.subr.bf16.mxu0 0
      %2024 = vmatpush1.bf16.msra.mxu0 0
      %2025 = vmatprep.subr.bf16.mxu0 0
      %2026 = vmatpush1.bf16.msra.mxu0 %v2011
      %2027 = vmatprep.subr.bf16.mxu0 0
      %2028 = vmatpush1.bf16.msra.mxu0 %v2004
      %2029 = vmatprep.subr.bf16.mxu0 0
      %2030 = vmatpush2.bf16.msra.mxu0 0
      %2031 = vmatprep.subr.bf16.mxu0 0
      %2032 = vmatpush2.bf16.msra.mxu0 0
      %2033 = vmatprep.subr.bf16.mxu0 0
      %2034 = vmatpush2.bf16.msra.mxu0 0
      %2035 = vmatprep.subr.bf16.mxu0 0
      %2036 = vmatpush2.bf16.msra.mxu0 0
      %2037 = vmatprep.subr.bf16.mxu0 0
      %2038 = vmatpush2.bf16.msra.mxu0 0
      %2039 = vmatprep.subr.bf16.mxu0 0
      %2040 = vmatpush2.bf16.msra.mxu0 0
      %2041 = vmatprep.subr.bf16.mxu0 0
      %2042 = vmatpush2.bf16.msra.mxu0 0
      %2043 = vmatprep.subr.bf16.mxu0 0
      %2044 = vmatpush2.bf16.msra.mxu0 0
      %2045 = vmatprep.mubr.bf16.mxu0 0
      %2046 = vmatmul.mubr.bf16.gmra.mxu0 %v2008
      %v2047 = vpop.f32.mrf.mxu0
      %v2048 = vadd.f32 %v1992, %v2047
      %v2049 = vpop.f32.mrf.mxu0
      %v2050 = vpop.f32.mrf.mxu0
      %v2051 = vadd.f32 %v1995, %v2050
      %v2052 = vpop.f32.mrf.mxu0
      %2053 = vdwg.mxu0
      %s2054 = scalar_lea.vmem %s6, 24
      %v2055 = vld [vmem:[%s2054] sm:$0xf]
      %v2056 = vld [vmem:[%s2054 + $0x4] sm:$0xf]
      %v2057 = vld [vmem:[%s2054 + $0x8] sm:$0xf]
      %v2061 = vunpack.c.l.b16 %v2055
      %v2062 = vunpack.c.l.b16 %v2056
      %v2063 = vunpack.c.l.b16 %v2057
      %v2064 = vpack.c.b16 %v2062, %v2061
      %v2065 = vpack.c.b16 %v2063, %v2063
      %v2068 = vsel %vm1949, %v1927, 0
      %v2071 = vsel %vm1953, %v2065, 0
      %2073 = vmatprep.subr.bf16.mxu0 0
      %2074 = vmatpush1.bf16.msra.mxu0 0
      %2075 = vmatprep.subr.bf16.mxu0 0
      %2076 = vmatpush1.bf16.msra.mxu0 0
      %2077 = vmatprep.subr.bf16.mxu0 0
      %2078 = vmatpush1.bf16.msra.mxu0 0
      %2079 = vmatprep.subr.bf16.mxu0 0
      %2080 = vmatpush1.bf16.msra.mxu0 0
      %2081 = vmatprep.subr.bf16.mxu0 0
      %2082 = vmatpush1.bf16.msra.mxu0 0
      %2083 = vmatprep.subr.bf16.mxu0 0
      %2084 = vmatpush1.bf16.msra.mxu0 0
      %2085 = vmatprep.subr.bf16.mxu0 0
      %2086 = vmatpush1.bf16.msra.mxu0 %v2071
      %2087 = vmatprep.subr.bf16.mxu0 0
      %2088 = vmatpush1.bf16.msra.mxu0 %v2064
      %2089 = vmatprep.subr.bf16.mxu0 0
      %2090 = vmatpush2.bf16.msra.mxu0 0
      %2091 = vmatprep.subr.bf16.mxu0 0
      %2092 = vmatpush2.bf16.msra.mxu0 0
      %2093 = vmatprep.subr.bf16.mxu0 0
      %2094 = vmatpush2.bf16.msra.mxu0 0
      %2095 = vmatprep.subr.bf16.mxu0 0
      %2096 = vmatpush2.bf16.msra.mxu0 0
      %2097 = vmatprep.subr.bf16.mxu0 0
      %2098 = vmatpush2.bf16.msra.mxu0 0
      %2099 = vmatprep.subr.bf16.mxu0 0
      %2100 = vmatpush2.bf16.msra.mxu0 0
      %2101 = vmatprep.subr.bf16.mxu0 0
      %2102 = vmatpush2.bf16.msra.mxu0 0
      %2103 = vmatprep.subr.bf16.mxu0 0
      %2104 = vmatpush2.bf16.msra.mxu0 0
      %2105 = vmatprep.mubr.bf16.mxu0 0
      %2106 = vmatmul.mubr.bf16.gmra.mxu0 %v2068
      %v2107 = vpop.f32.mrf.mxu0
      %v2108 = vadd.f32 0.0, %v2107
      %v2109 = vpop.f32.mrf.mxu0
      %v2110 = vpop.f32.mrf.mxu0
      %v2111 = vadd.f32 0.0, %v2110
      %v2112 = vpop.f32.mrf.mxu0
      %2113 = vdwg.mxu0
      %v2114 = vadd.f32 %v2048, %v2108
      %v2115 = vadd.f32 %v2051, %v2111
      %v2116 = vld [vmem:[%s7] sm:$0x1]
      %v2118 = vlaneseq
      %v2119 = vshrl.u32 %v2118, 7
      %v2120 = vsub.s32 0, %v2119
      %v2121 = vrot.slane %v2116, %v2120
      %v2123 = vmul.f32 %v2114, %v2121
      %v2124 = vmul.f32 %v2115, %v2121
      %v2125 = vld [vmem:[%s8] sm:$0x1]
      %v2127 = vlaneseq
      %v2128 = vshrl.u32 %v2127, 7
      %v2129 = vsub.s32 0, %v2128
      %v2130 = vrot.slane %v2125, %v2129
      %v2132 = vadd.f32 %v2123, %v2130
      %v2133 = vadd.f32 %v2124, %v2130
      %v2134 = vmax.f32 %v2132, 0.0
      %v2135 = vmax.f32 %v2133, 0.0
      %2136 = vst.msk [vmem:[%s493] sm:$0xff] %vm1595, %v2134
      %2137 = vst.msk [vmem:[%s493 + $0x8] sm:$0xff] %vm1595, %v2135
      %s2138 = smul.u32 2, %s25
      %p2139 = scmp.lt.s32.totalorder %s24, 1
      %s2140 = scalar_select %p2139, %s24, 1
      %p2141 = scmp.lt.s32.totalorder %s2138, 7
      %s2142 = scalar_select %p2141, %s2138, 7
      %s2143 = smul.addr %s2140, 8
      %s2144 = sadd.s32 %s2142, %s2143
      %s2145 = smul.addr %s2144, 8
      %s2146 = scalar_lea.vmem %s9, %s2145
      // Predicated region
      $region57: #{down_forward.1} parent=55 // pred_check
        %p2147 = pneg %p274
      $region58: #{down_forward.1} parent=55 // pred_check_branch
        %2149 = sbr.rel (%p2147) target = $region60
      $region59: #{down_forward.1} parent=55 // pred_region
        %s2150 = smul.u32 2, %s25
      $region60: #{down_forward.1} parent=55 // pred_fallthru
        _
    $region56: #{down_forward.1} parent=5 // pred_fallthru
      _
    %p2151 = scmp.le.s32.totalorder 2, %s15
    // Predicated region
    $region61: #{down_forward.1} parent=5 // pred_check
      %p2152 = pneg %p2151
    $region62: #{down_forward.1} parent=5 // pred_check_branch
      %2154 = sbr.rel (%p2152) target = $region64
    $region63: #{down_forward.1} parent=5 // pred_region
      %s2155 = ssub.s32 %s15, 2
      // Predicated region
      $region65: #{down_forward.1} parent=63 // pred_check
        %p2156 = pneg %p280
      $region66: #{down_forward.1} parent=63 // pred_check_branch
        %2158 = sbr.rel (%p2156) target = $region68
      $region67: #{down_forward.1} parent=63 // pred_region
        %s2159 = smul.u32 2, %s27
        %p2160 = scmp.lt.s32.totalorder %s26, 1
        %s2161 = scalar_select %p2160, %s26, 1
        %p2162 = scmp.lt.s32.totalorder %s2159, 7
        %s2163 = scalar_select %p2162, %s2159, 7
        %s2164 = smul.addr %s2161, 8
        %s2165 = sadd.s32 %s2163, %s2164
        %s2166 = smul.addr %s2165, 8
        %s2167 = scalar_lea.vmem %s9, %s2166
      $region68: #{down_forward.1} parent=63 // pred_fallthru
        _
    $region64: #{down_forward.1} parent=5 // pred_fallthru
      _
  $region6: #{down_forward.1} parent=0 // loop_footer
    %s19 = sadd.s32 1, %s15
  $region7: #{down_forward.1} parent=0 // loop_footer_branch
    %14 = sbr.rel target = $region3
  $region8: #{down_forward.1} parent=0 // loop_exit
    _

</llo_original>
